<compile_context>
chip_gen: v7x
topology: tpu7x:2x2x1
jax: 0.10.0
libtpu: 0.0.40
codegen_flags: <defaults>
</compile_context>

<pallas_src>
import jax
import jax.numpy as jnp
from jax import lax
from jax.experimental import pallas as pl
from jax.experimental.pallas import tpu as pltpu


# ----------------------------------------------------------------------------
# Fused kernel builder: full TextEncoderTCN forward for Bt batch elements.
# Layout inside the kernel: (channels, Bt*T) with lane index = b*T + t.
# ----------------------------------------------------------------------------
def _build_fused_kernel(level_cfgs, T, Bt):
    """level_cfgs: tuple of (c_in, c_out, K, dilation, has_downsample)."""
    n_w = sum(2 * K + 2 for (_, _, K, _, _) in level_cfgs) + 2

    def kernel(*refs):
        x_ref = refs[0]
        w_refs = refs[1:1 + n_w]
        y_ref = refs[1 + n_w]
        ymax_ref = refs[2 + n_w]

        h = x_ref[0]                               # (C0, N) f32, lane = b*T + t
        N = h.shape[1]

        # Per-segment time index (hoisted once; T is 128 here -> bitwise and).
        lane = lax.broadcasted_iota(jnp.int32, (1, N), 1)
        t_in_seg = (lane & (T - 1)) if (T & (T - 1)) == 0 else lane % T
        mask_cache = {}

        def shifted_tap(h_f32, shift):
            # tap[:, b*T + t] = h[:, b*T + t - shift] if t >= shift else 0
            # (causal shift within each batch segment).  roll = XLU, mask = 1 vmul.
            if shift not in mask_cache:
                mask_cache[shift] = (t_in_seg >= shift).astype(jnp.float32)
            rolled = pltpu.roll(h_f32, shift, axis=1)
            return (rolled * mask_cache[shift]).astype(jnp.bfloat16)

        wi = 0
        for (c_in, c_out, K, dil, has_ds) in level_cfgs:
            w1_rest = w_refs[wi:wi + K - 1]; wi += K - 1          # taps 0..K-2
            w1_last = w_refs[wi]; b1s = w_refs[wi + 1]; wi += 2   # tap K-1 (+ downsample rows)
            w2_rest = w_refs[wi:wi + K - 1]; wi += K - 1
            w2_last = w_refs[wi]; b2 = w_refs[wi + 1]; wi += 2

            h_b = h.astype(jnp.bfloat16)

            # ---- conv1 (causal dilated conv == Conv1d + Chomp1d), with the 1x1
            # downsample fused into the unshifted-tap matmul when present. -----
            acc = jnp.dot(w1_last[...], h_b,
                          preferred_element_type=jnp.float32) + b1s[...]
            c1 = acc[:c_out]
            for k in range(K - 1):
                s = (K - 1 - k) * dil
                c1 = c1 + jnp.dot(w1_rest[k][...], shifted_tap(h, s),
                                  preferred_element_type=jnp.float32)
            h1 = jnp.maximum(c1, 0.0)
            # dropout1: identity (inference semantics)

            # ---- conv2 -------------------------------------------------------
            h1_b = h1.astype(jnp.bfloat16)
            c2 = jnp.dot(w2_last[...], h1_b,
                         preferred_element_type=jnp.float32) + b2[...]
            for k in range(K - 1):
                s = (K - 1 - k) * dil
                c2 = c2 + jnp.dot(w2_rest[k][...], shifted_tap(h1, s),
                                  preferred_element_type=jnp.float32)
            h2 = jnp.maximum(c2, 0.0)
            # dropout2: identity (inference semantics)

            # ---- residual branch + final ReLU --------------------------------
            res = acc[c_out:] if has_ds else h
            h = jnp.maximum(h2 + res, 0.0)         # (C_out, N) f32

        # ---- decoder Linear + max over time (per 128-lane batch segment) ----
        wdec, bdec = w_refs[wi], w_refs[wi + 1]
        y = jnp.dot(wdec[...], h.astype(jnp.bfloat16),
                    preferred_element_type=jnp.float32) + bdec[...]
        y_ref[0] = y                               # (Wf, Bt*T): wide lane-dense store
        seg_max = [jnp.max(y[:, b * T:(b + 1) * T], axis=1, keepdims=True)
                   for b in range(Bt)]             # lane-aligned 128-wide slices
        ymax_ref[0] = jnp.concatenate(seg_max, axis=0)   # (Bt*Wf, 1)

    return kernel


# ----------------------------------------------------------------------------
# Wrapper: TextEncoderTCN.forward  —  x: (B, T, E)  ->  (y (B,T,Wf), max (B,Wf))
# ----------------------------------------------------------------------------
def text_encoder_tcn(x, params, *, batch_tile=None):
    B, T, E = x.shape
    if batch_tile is None:
        batch_tile = next(bt for bt in (8, 4, 2, 1) if B % bt == 0)
    Bt = batch_tile
    assert B % Bt == 0, (B, Bt)
    G = B // Bt                                     # grid length (keep even for v7x)
    N = Bt * T

    # Layout plumbing only: (batch-tile, time) flattened onto the 128-lane axis.
    x_blk = (jnp.swapaxes(x, 1, 2)                  # (B, E, T)
             .reshape(G, Bt, E, T)
             .transpose(0, 2, 1, 3)
             .reshape(G, E, N))

    level_cfgs = []
    weights = []
    for li, p in enumerate(params["tcn"]):
        c_out, c_in, K = p["w1"].shape
        dil = 2 ** li
        has_ds = "wd" in p
        level_cfgs.append((c_in, c_out, K, dil, has_ds))

        # weight_norm folded (g == ||v|| at init -> w == v); bf16 for the MXU.
        w1 = p["w1"].astype(jnp.bfloat16)           # (c_out, c_in, K)
        w2 = p["w2"].astype(jnp.bfloat16)           # (c_out, c_out, K)
        w1_last, b1s = w1[:, :, K - 1], p["b1"]
        if has_ds:                                   # fuse 1x1 downsample into tap K-1
            w1_last = jnp.concatenate([w1_last, p["wd"].astype(jnp.bfloat16)], axis=0)
            b1s = jnp.concatenate([p["b1"], p["bd"]], axis=0)
        weights += [w1[:, :, k] for k in range(K - 1)]
        weights += [w1_last, b1s.reshape(-1, 1).astype(jnp.float32)]
        weights += [w2[:, :, k] for k in range(K - 1)]
        weights += [w2[:, :, K - 1], p["b2"].reshape(-1, 1).astype(jnp.float32)]

    wf = params["dec_w"].shape[0]
    weights += [params["dec_w"].astype(jnp.bfloat16),
                params["dec_b"].reshape(wf, 1).astype(jnp.float32)]

    in_specs = [pl.BlockSpec((1, E, N), lambda g: (g, 0, 0))]
    # All weights are 2D with constant index_maps -> stay VMEM-resident.
    in_specs += [pl.BlockSpec(w.shape, lambda g: (0, 0)) for w in weights]
    out_specs = [pl.BlockSpec((1, wf, N), lambda g: (g, 0, 0)),
                 pl.BlockSpec((1, Bt * wf, 1), lambda g: (g, 0, 0))]

    kernel = _build_fused_kernel(tuple(level_cfgs), T, Bt)

    y_ct, ymax_ct = pl.pallas_call(
        kernel,
        out_shape=(jax.ShapeDtypeStruct((G, wf, N), jnp.float32),
                   jax.ShapeDtypeStruct((G, Bt * wf, 1), jnp.float32)),
        grid_spec=pltpu.PrefetchScalarGridSpec(
            num_scalar_prefetch=0,
            grid=(G,),
            in_specs=in_specs,
            out_specs=out_specs,
        ),
        compiler_params=pltpu.CompilerParams(
            dimension_semantics=("parallel",)),
    )(x_blk, *weights)

    # Layout plumbing back to the module's (B, T, Wf) / (B, Wf) outputs.
    y = y_ct.reshape(G, wf, Bt, T).transpose(0, 2, 3, 1).reshape(B, T, wf)
    ymax = ymax_ct[:, :, 0].reshape(B, wf)
    return y, ymax


# ----------------------------------------------------------------------------
# Deterministic parameter init (mirrors module shapes; weight_norm folded).
# ----------------------------------------------------------------------------
def init_params(key, embed_size, hidden_size, word_f, kernel_size):
    params = {"tcn": []}
    c_in = embed_size
    num_channels = [hidden_size]                    # TextEncoderTCN: [args.hidden_size]
    for c_out in num_channels:
        key, k1, k2, k3, k4, k5, k6 = jax.random.split(key, 7)
        # weight_norm(dim=0) folded: at init g = ||v||, so w == v.
        w1 = 0.01 * jax.random.normal(k1, (c_out, c_in, kernel_size), jnp.float32)
        w2 = 0.01 * jax.random.normal(k2, (c_out, c_out, kernel_size), jnp.float32)
        b1_bound = 1.0 / (c_in * kernel_size) ** 0.5
        b2_bound = 1.0 / (c_out * kernel_size) ** 0.5
        b1 = jax.random.uniform(k3, (c_out,), jnp.float32, -b1_bound, b1_bound)
        b2 = jax.random.uniform(k4, (c_out,), jnp.float32, -b2_bound, b2_bound)
        p = {"w1": w1, "b1": b1, "w2": w2, "b2": b2}
        if c_in != c_out:
            p["wd"] = 0.01 * jax.random.normal(k5, (c_out, c_in), jnp.float32)
            bd_bound = 1.0 / c_in ** 0.5
            p["bd"] = jax.random.uniform(k6, (c_out,), jnp.float32, -bd_bound, bd_bound)
        params["tcn"].append(p)
        c_in = c_out
    key, k7 = jax.random.split(key)
    params["dec_w"] = 0.01 * jax.random.normal(k7, (word_f, hidden_size), jnp.float32)
    params["dec_b"] = jnp.zeros((word_f,), jnp.float32)   # decoder.bias.fill_(0)
    return params


# ----------------------------------------------------------------------------
# Pure-JAX reference (matches the PyTorch graph) for verification.
# ----------------------------------------------------------------------------
def text_encoder_tcn_ref(x, params, kernel_size):
    xc = jnp.swapaxes(x, 1, 2)                      # (B, E, T)
    T = xc.shape[2]
    h = xc
    for li, p in enumerate(params["tcn"]):
        dil = 2 ** li
        pad = (kernel_size - 1) * dil

        def conv(inp, w, b, dil=dil, pad=pad):
            y = lax.conv_general_dilated(
                inp, w, window_strides=(1,), padding=[(pad, pad)],
                rhs_dilation=(dil,), dimension_numbers=("NCH", "OIH", "NCH"))
            return y[:, :, :T] + b[None, :, None]   # Chomp1d + bias

        a = jax.nn.relu(conv(h, p["w1"], p["b1"]))
        a = jax.nn.relu(conv(a, p["w2"], p["b2"]))
        if "wd" in p:
            res = jnp.einsum("oi,bit->bot", p["wd"], h) + p["bd"][None, :, None]
        else:
            res = h
        h = jax.nn.relu(a + res)
    y = jnp.einsum("fh,bht->btf", params["dec_w"], h) + params["dec_b"][None, None, :]
    return y, jnp.max(y, axis=1)


# ----------------------------------------------------------------------------
if __name__ == "__main__":
    B, T = 8, 128                      # T = 128 -> every store lane-dense
    embed_size, hidden_size, word_f = 64, 32, 32
    kernel_size = 2
    batch_tile = 4                     # grid = (2,): even grid keeps both v7x TCs busy

    key = jax.random.PRNGKey(0)
    key, kx = jax.random.split(key)
    x = jax.random.normal(kx, (B, T, embed_size), jnp.float32)
    params = init_params(key, embed_size, hidden_size, word_f, kernel_size)

    run = jax.jit(lambda xx, pp: text_encoder_tcn(xx, pp, batch_tile=batch_tile))
    y, ymax = jax.block_until_ready(run(x, params))

    y_ref, ymax_ref = text_encoder_tcn_ref(x, params, kernel_size)
    assert y.shape == (B, T, word_f), y.shape
    assert ymax.shape == (B, word_f), ymax.shape
    # bf16 MXU inputs (f32 accumulate) -> slightly looser tolerance than pure f32.
    assert jnp.allclose(y, y_ref, atol=2e-3, rtol=2e-2), \
        float(jnp.max(jnp.abs(y - y_ref)))
    assert jnp.allclose(ymax, ymax_ref, atol=2e-3, rtol=2e-2), \
        float(jnp.max(jnp.abs(ymax - ymax_ref)))

    print("KERNEL_OK")
</pallas_src>

<mosaic_0001>
module attributes {stable_mosaic.version = 11 : i64} {
  func.func @kernel(%arg0: i32, %arg1: memref<1x64x512xf32, #tpu.memory_space<vmem>>, %arg2: memref<32x64xbf16, #tpu.memory_space<vmem>>, %arg3: memref<64x64xbf16, #tpu.memory_space<vmem>>, %arg4: memref<64x1xf32, #tpu.memory_space<vmem>>, %arg5: memref<32x32xbf16, #tpu.memory_space<vmem>>, %arg6: memref<32x32xbf16, #tpu.memory_space<vmem>>, %arg7: memref<32x1xf32, #tpu.memory_space<vmem>>, %arg8: memref<32x32xbf16, #tpu.memory_space<vmem>>, %arg9: memref<32x1xf32, #tpu.memory_space<vmem>>, %arg10: memref<1x32x512xf32, #tpu.memory_space<vmem>>, %arg11: memref<1x128x1xf32, #tpu.memory_space<vmem>>) attributes {dimension_semantics = [#tpu.dimension_semantics<parallel>], iteration_bounds = array<i64: 2>, scalar_prefetch = 0 : i64, scratch_operands = 0 : i64, tpu.core_type = #tpu.core_type<tc>, window_params = [{transform_indices = @transform_0, window_bounds = array<i64: 1, 64, 512>}, {pipeline_mode = #tpu.pipeline_mode<synchronous>, transform_indices = @transform_1, window_bounds = array<i64: 32, 64>}, {pipeline_mode = #tpu.pipeline_mode<synchronous>, transform_indices = @transform_2, window_bounds = array<i64: 64, 64>}, {pipeline_mode = #tpu.pipeline_mode<synchronous>, transform_indices = @transform_3, window_bounds = array<i64: 64, 1>}, {pipeline_mode = #tpu.pipeline_mode<synchronous>, transform_indices = @transform_4, window_bounds = array<i64: 32, 32>}, {pipeline_mode = #tpu.pipeline_mode<synchronous>, transform_indices = @transform_5, window_bounds = array<i64: 32, 32>}, {pipeline_mode = #tpu.pipeline_mode<synchronous>, transform_indices = @transform_6, window_bounds = array<i64: 32, 1>}, {pipeline_mode = #tpu.pipeline_mode<synchronous>, transform_indices = @transform_7, window_bounds = array<i64: 32, 32>}, {pipeline_mode = #tpu.pipeline_mode<synchronous>, transform_indices = @transform_8, window_bounds = array<i64: 32, 1>}, {transform_indices = @transform_9, window_bounds = array<i64: 1, 32, 512>}, {transform_indices = @transform_10, window_bounds = array<i64: 1, 128, 1>}]} {
    %c0 = arith.constant 0 : index
    %c0_0 = arith.constant 0 : index
    %c0_1 = arith.constant 0 : index
    %0 = vector.load %arg1[%c0, %c0_0, %c0_1] : memref<1x64x512xf32, #tpu.memory_space<vmem>>, vector<1x64x512xf32>
    %1 = vector.shape_cast %0 : vector<1x64x512xf32> to vector<64x512xf32>
    %2 = tpu.iota {dimensions = array<i32: 1>} : vector<1x512xi32>
    %c127_i32 = arith.constant 127 : i32
    %3 = vector.broadcast %c127_i32 : i32 to vector<1x512xi32>
    %4 = arith.andi %2, %3 : vector<1x512xi32>
    %5 = arith.truncf %1 : vector<64x512xf32> to vector<64x512xbf16>
    %c0_2 = arith.constant 0 : index
    %c0_3 = arith.constant 0 : index
    %6 = vector.load %arg3[%c0_2, %c0_3] : memref<64x64xbf16, #tpu.memory_space<vmem>>, vector<64x64xbf16>
    %cst = arith.constant dense<0.000000e+00> : vector<64x512xf32>
    %7 = tpu.matmul %6, %5, %cst {dimension_numbers = #tpu.dot_dimension_numbers<[1], [0], [0], [1], [0, 0, 1, 1], [], []>} : vector<64x64xbf16>, vector<64x512xbf16>, vector<64x512xf32> -> vector<64x512xf32>
    %c0_4 = arith.constant 0 : index
    %c0_5 = arith.constant 0 : index
    %8 = vector.load %arg4[%c0_4, %c0_5] : memref<64x1xf32, #tpu.memory_space<vmem>>, vector<64x1xf32>
    %9 = vector.broadcast %8 : vector<64x1xf32> to vector<64x512xf32>
    %10 = arith.addf %7, %9 : vector<64x512xf32>
    %11 = vector.extract_strided_slice %10 {offsets = [0, 0], sizes = [32, 512], strides = [1, 1]} : vector<64x512xf32> to vector<32x512xf32>
    %c0_6 = arith.constant 0 : index
    %c0_7 = arith.constant 0 : index
    %12 = vector.load %arg2[%c0_6, %c0_7] : memref<32x64xbf16, #tpu.memory_space<vmem>>, vector<32x64xbf16>
    %c1_i32 = arith.constant 1 : i32
    %13 = vector.broadcast %c1_i32 : i32 to vector<1x512xi32>
    %14 = arith.cmpi sge, %4, %13 : vector<1x512xi32>
    %15 = arith.extui %14 : vector<1x512xi1> to vector<1x512xi32>
    %16 = arith.sitofp %15 : vector<1x512xi32> to vector<1x512xf32>
    %c1_i32_8 = arith.constant 1 : i32
    %17 = tpu.dynamic_rotate %1 by %c1_i32_8 dim 1 : vector<64x512xf32>, i32 -> vector<64x512xf32>
    %18 = vector.broadcast %16 : vector<1x512xf32> to vector<64x512xf32>
    %19 = arith.mulf %17, %18 : vector<64x512xf32>
    %20 = arith.truncf %19 : vector<64x512xf32> to vector<64x512xbf16>
    %cst_9 = arith.constant dense<0.000000e+00> : vector<32x512xf32>
    %21 = tpu.matmul %12, %20, %cst_9 {dimension_numbers = #tpu.dot_dimension_numbers<[1], [0], [0], [1], [0, 0, 1, 1], [], []>} : vector<32x64xbf16>, vector<64x512xbf16>, vector<32x512xf32> -> vector<32x512xf32>
    %22 = arith.addf %11, %21 : vector<32x512xf32>
    %cst_10 = arith.constant 0.000000e+00 : f32
    %23 = vector.broadcast %cst_10 : f32 to vector<32x512xf32>
    %24 = arith.maximumf %22, %23 : vector<32x512xf32>
    %25 = arith.truncf %24 : vector<32x512xf32> to vector<32x512xbf16>
    %c0_11 = arith.constant 0 : index
    %c0_12 = arith.constant 0 : index
    %26 = vector.load %arg6[%c0_11, %c0_12] : memref<32x32xbf16, #tpu.memory_space<vmem>>, vector<32x32xbf16>
    %cst_13 = arith.constant dense<0.000000e+00> : vector<32x512xf32>
    %27 = tpu.matmul %26, %25, %cst_13 {dimension_numbers = #tpu.dot_dimension_numbers<[1], [0], [0], [1], [0, 0, 1, 1], [], []>} : vector<32x32xbf16>, vector<32x512xbf16>, vector<32x512xf32> -> vector<32x512xf32>
    %c0_14 = arith.constant 0 : index
    %c0_15 = arith.constant 0 : index
    %28 = vector.load %arg7[%c0_14, %c0_15] : memref<32x1xf32, #tpu.memory_space<vmem>>, vector<32x1xf32>
    %29 = vector.broadcast %28 : vector<32x1xf32> to vector<32x512xf32>
    %30 = arith.addf %27, %29 : vector<32x512xf32>
    %c0_16 = arith.constant 0 : index
    %c0_17 = arith.constant 0 : index
    %31 = vector.load %arg5[%c0_16, %c0_17] : memref<32x32xbf16, #tpu.memory_space<vmem>>, vector<32x32xbf16>
    %c1_i32_18 = arith.constant 1 : i32
    %32 = tpu.dynamic_rotate %24 by %c1_i32_18 dim 1 : vector<32x512xf32>, i32 -> vector<32x512xf32>
    %33 = vector.broadcast %16 : vector<1x512xf32> to vector<32x512xf32>
    %34 = arith.mulf %32, %33 : vector<32x512xf32>
    %35 = arith.truncf %34 : vector<32x512xf32> to vector<32x512xbf16>
    %cst_19 = arith.constant dense<0.000000e+00> : vector<32x512xf32>
    %36 = tpu.matmul %31, %35, %cst_19 {dimension_numbers = #tpu.dot_dimension_numbers<[1], [0], [0], [1], [0, 0, 1, 1], [], []>} : vector<32x32xbf16>, vector<32x512xbf16>, vector<32x512xf32> -> vector<32x512xf32>
    %37 = arith.addf %30, %36 : vector<32x512xf32>
    %cst_20 = arith.constant 0.000000e+00 : f32
    %38 = vector.broadcast %cst_20 : f32 to vector<32x512xf32>
    %39 = arith.maximumf %37, %38 : vector<32x512xf32>
    %40 = vector.extract_strided_slice %10 {offsets = [32, 0], sizes = [32, 512], strides = [1, 1]} : vector<64x512xf32> to vector<32x512xf32>
    %41 = arith.addf %39, %40 : vector<32x512xf32>
    %cst_21 = arith.constant 0.000000e+00 : f32
    %42 = vector.broadcast %cst_21 : f32 to vector<32x512xf32>
    %43 = arith.maximumf %41, %42 : vector<32x512xf32>
    %c0_22 = arith.constant 0 : index
    %c0_23 = arith.constant 0 : index
    %44 = vector.load %arg8[%c0_22, %c0_23] : memref<32x32xbf16, #tpu.memory_space<vmem>>, vector<32x32xbf16>
    %45 = arith.truncf %43 : vector<32x512xf32> to vector<32x512xbf16>
    %cst_24 = arith.constant dense<0.000000e+00> : vector<32x512xf32>
    %46 = tpu.matmul %44, %45, %cst_24 {dimension_numbers = #tpu.dot_dimension_numbers<[1], [0], [0], [1], [0, 0, 1, 1], [], []>} : vector<32x32xbf16>, vector<32x512xbf16>, vector<32x512xf32> -> vector<32x512xf32>
    %c0_25 = arith.constant 0 : index
    %c0_26 = arith.constant 0 : index
    %47 = vector.load %arg9[%c0_25, %c0_26] : memref<32x1xf32, #tpu.memory_space<vmem>>, vector<32x1xf32>
    %48 = vector.broadcast %47 : vector<32x1xf32> to vector<32x512xf32>
    %49 = arith.addf %46, %48 : vector<32x512xf32>
    %c0_27 = arith.constant 0 : index
    %c0_28 = arith.constant 0 : index
    %c0_29 = arith.constant 0 : index
    %50 = vector.load %arg10[%c0_27, %c0_28, %c0_29] : memref<1x32x512xf32, #tpu.memory_space<vmem>>, vector<1x32x512xf32>
    %51 = vector.shape_cast %50 : vector<1x32x512xf32> to vector<32x512xf32>
    %52 = vector.shape_cast %49 : vector<32x512xf32> to vector<1x32x512xf32>
    tpu.vector_store %arg10[%c0_27, %c0_28, %c0_29], %52 {strides = array<i32>} : memref<1x32x512xf32, #tpu.memory_space<vmem>>, vector<1x32x512xf32>,
    %53 = vector.extract_strided_slice %49 {offsets = [0, 0], sizes = [32, 128], strides = [1, 1]} : vector<32x512xf32> to vector<32x128xf32>
    %cst_30 = arith.constant dense<0xFF800000> : vector<32xf32>
    %54 = vector.multi_reduction <maximumf>, %53, %cst_30 [1] : vector<32x128xf32> to vector<32xf32>
    %55 = vector.shape_cast %54 : vector<32xf32> to vector<32x1xf32>
    %56 = vector.extract_strided_slice %49 {offsets = [0, 128], sizes = [32, 128], strides = [1, 1]} : vector<32x512xf32> to vector<32x128xf32>
    %cst_31 = arith.constant dense<0xFF800000> : vector<32xf32>
    %57 = vector.multi_reduction <maximumf>, %56, %cst_31 [1] : vector<32x128xf32> to vector<32xf32>
    %58 = vector.shape_cast %57 : vector<32xf32> to vector<32x1xf32>
    %59 = vector.extract_strided_slice %49 {offsets = [0, 256], sizes = [32, 128], strides = [1, 1]} : vector<32x512xf32> to vector<32x128xf32>
    %cst_32 = arith.constant dense<0xFF800000> : vector<32xf32>
    %60 = vector.multi_reduction <maximumf>, %59, %cst_32 [1] : vector<32x128xf32> to vector<32xf32>
    %61 = vector.shape_cast %60 : vector<32xf32> to vector<32x1xf32>
    %62 = vector.extract_strided_slice %49 {offsets = [0, 384], sizes = [32, 128], strides = [1, 1]} : vector<32x512xf32> to vector<32x128xf32>
    %cst_33 = arith.constant dense<0xFF800000> : vector<32xf32>
    %63 = vector.multi_reduction <maximumf>, %62, %cst_33 [1] : vector<32x128xf32> to vector<32xf32>
    %64 = vector.shape_cast %63 : vector<32xf32> to vector<32x1xf32>
    %65 = tpu.concatenate %55, %58, %61, %64 in 0 : vector<32x1xf32>, vector<32x1xf32>, vector<32x1xf32>, vector<32x1xf32> -> vector<128x1xf32>
    %c0_34 = arith.constant 0 : index
    %c0_35 = arith.constant 0 : index
    %c0_36 = arith.constant 0 : index
    %66 = vector.load %arg11[%c0_34, %c0_35, %c0_36] : memref<1x128x1xf32, #tpu.memory_space<vmem>>, vector<1x128x1xf32>
    %67 = vector.shape_cast %66 : vector<1x128x1xf32> to vector<128x1xf32>
    %68 = vector.shape_cast %65 : vector<128x1xf32> to vector<1x128x1xf32>
    tpu.vector_store %arg11[%c0_34, %c0_35, %c0_36], %68 {strides = array<i32>} : memref<1x128x1xf32, #tpu.memory_space<vmem>>, vector<1x128x1xf32>,
    return
  }
  func.func @transform_0(%arg0: i32) -> (i32, i32, i32) {
    %c0_i32 = arith.constant 0 : i32
    %c0_i32_0 = arith.constant 0 : i32
    %c0_i32_1 = arith.constant 0 : i32
    return %arg0, %c0_i32, %c0_i32_0 : i32, i32, i32
  }
  func.func @transform_1(%arg0: i32) -> (i32, i32) {
    %c0_i32 = arith.constant 0 : i32
    %c0_i32_0 = arith.constant 0 : i32
    %c0_i32_1 = arith.constant 0 : i32
    return %c0_i32, %c0_i32_0 : i32, i32
  }
  func.func @transform_2(%arg0: i32) -> (i32, i32) {
    %c0_i32 = arith.constant 0 : i32
    %c0_i32_0 = arith.constant 0 : i32
    %c0_i32_1 = arith.constant 0 : i32
    return %c0_i32, %c0_i32_0 : i32, i32
  }
  func.func @transform_3(%arg0: i32) -> (i32, i32) {
    %c0_i32 = arith.constant 0 : i32
    %c0_i32_0 = arith.constant 0 : i32
    %c0_i32_1 = arith.constant 0 : i32
    return %c0_i32, %c0_i32_0 : i32, i32
  }
  func.func @transform_4(%arg0: i32) -> (i32, i32) {
    %c0_i32 = arith.constant 0 : i32
    %c0_i32_0 = arith.constant 0 : i32
    %c0_i32_1 = arith.constant 0 : i32
    return %c0_i32, %c0_i32_0 : i32, i32
  }
  func.func @transform_5(%arg0: i32) -> (i32, i32) {
    %c0_i32 = arith.constant 0 : i32
    %c0_i32_0 = arith.constant 0 : i32
    %c0_i32_1 = arith.constant 0 : i32
    return %c0_i32, %c0_i32_0 : i32, i32
  }
  func.func @transform_6(%arg0: i32) -> (i32, i32) {
    %c0_i32 = arith.constant 0 : i32
    %c0_i32_0 = arith.constant 0 : i32
    %c0_i32_1 = arith.constant 0 : i32
    return %c0_i32, %c0_i32_0 : i32, i32
  }
  func.func @transform_7(%arg0: i32) -> (i32, i32) {
    %c0_i32 = arith.constant 0 : i32
    %c0_i32_0 = arith.constant 0 : i32
    %c0_i32_1 = arith.constant 0 : i32
    return %c0_i32, %c0_i32_0 : i32, i32
  }
  func.func @transform_8(%arg0: i32) -> (i32, i32) {
    %c0_i32 = arith.constant 0 : i32
    %c0_i32_0 = arith.constant 0 : i32
    %c0_i32_1 = arith.constant 0 : i32
    return %c0_i32, %c0_i32_0 : i32, i32
  }
  func.func @transform_9(%arg0: i32) -> (i32, i32, i32) {
    %c0_i32 = arith.constant 0 : i32
    %c0_i32_0 = arith.constant 0 : i32
    %c0_i32_1 = arith.constant 0 : i32
    return %arg0, %c0_i32, %c0_i32_0 : i32, i32, i32
  }
  func.func @transform_10(%arg0: i32) -> (i32, i32, i32) {
    %c0_i32 = arith.constant 0 : i32
    %c0_i32_0 = arith.constant 0 : i32
    %c0_i32_1 = arith.constant 0 : i32
    return %arg0, %c0_i32, %c0_i32_0 : i32, i32, i32
  }
}

</mosaic_0001>

<llo_original>
// kernel: squeeze.9
$region0: #{squeeze.9}
  %s0 = inlined_call_operand.vmem [shape: f32[2,128], index: 0, kind: input, shape index: {}]
  %s1 = inlined_call_operand.hbm [shape: f32[8,32], index: 1, kind: output, shape index: {}]
  $region1: #{squeeze.9} parent=0
    #allocation0 [shape = 'u8[4096]{0}', space=vmem, size = 0x1000, scoped, tag = 'operand span for operand 1']
    #allocation1 [shape = 's32[1]{0}', space=sflag, size = 0x4, scoped, tag = 'scoped memory for squeeze.9']
    #allocation2 [shape = 'u8[4096]{0}', space=vmem, size = 0x1000, scoped, tag = 'scoped mem for input reshape']
    %2 = vsyncpa [#allocation1], 0
    %s4 = sshllo.u32 0, 2
    %v5 = vld [vmem:[%s0] sm:%s4]
    %6 = vst [vmem:[#allocation2] sm:%s4] %v5
    %v7 = vld [vmem:[#allocation2] sm:$0x3]
    %vm8 = vcmask 261120
    %9 = vst.msk [vmem:[#allocation0] ss:$4 sm:$0x3] %vm8, %v7
    %v10 = vld [vmem:[#allocation2] sm:$0x3]
    %11 = vrot.lane.b32.xlu0 %v10, 96
    %v12 = vpop.permute.xlu0 %11
    %vm13 = vcmask 261120
    %s14 = scalar_lea.vmem [#allocation0], 1
    %15 = vst.msk [vmem:[%s14] ss:$4 sm:$0x3] %vm13, %v12
    %v16 = vld [vmem:[#allocation2] sm:$0x3]
    %17 = vrot.lane.b32.xlu0 %v16, 64
    %v18 = vpop.permute.xlu0 %17
    %vm19 = vcmask 261120
    %s20 = scalar_lea.vmem [#allocation0], 2
    %21 = vst.msk [vmem:[%s20] ss:$4 sm:$0x3] %vm19, %v18
    %v22 = vld [vmem:[#allocation2] sm:$0x3]
    %23 = vrot.lane.b32.xlu0 %v22, 32
    %v24 = vpop.permute.xlu0 %23
    %vm25 = vcmask 261120
    %s26 = scalar_lea.vmem [#allocation0], 3
    %27 = vst.msk [vmem:[%s26] ss:$4 sm:$0x3] %vm25, %v24
    %s29 = ssub.s32 128, 128
    %30 = vsyncadd [#allocation1], %s29
    %s32 = sshll.u32 [#allocation0], 4
    %s33 = int_to_ptr.vmem [resolvable:$true] %s32
    %35 = dma.vmem_to_hbm [thread:$0]  %s33, 128, %s1, [#allocation1]
    %36 = dma.done [#allocation1], 128
    %37 = vsyncpa [#allocation1], 1

// kernel: _lambda_.1
$region0: #{_lambda_.1}
  #allocation0 [shape = 'u32[]', space=smem, size = 0x4, offset = 0x4, fixed_abs, tag = 'smem constant byte address 0x4 - core index']
  #allocation1 [shape = 'u32[144,128]{1,0:T(1,128)}', space=vmem, size = 0x12000, scoped, tag = 'internal scratch']
  %s0 = inlined_call_operand.vmem [shape: f32[2,64,512], index: 0, kind: input, shape index: {}]
  %s1 = inlined_call_operand.vmem [shape: bf16[32,64], index: 1, kind: input, shape index: {}]
  %s2 = inlined_call_operand.vmem [shape: bf16[64,64], index: 2, kind: input, shape index: {}]
  %s3 = inlined_call_operand.vmem [shape: f32[64,1], index: 3, kind: input, shape index: {}]
  %s4 = inlined_call_operand.vmem [shape: bf16[32,32], index: 4, kind: input, shape index: {}]
  %s5 = inlined_call_operand.vmem [shape: bf16[32,32], index: 5, kind: input, shape index: {}]
  %s6 = inlined_call_operand.vmem [shape: f32[32,1], index: 6, kind: input, shape index: {}]
  %s7 = inlined_call_operand.vmem [shape: bf16[32,32], index: 7, kind: input, shape index: {}]
  %s8 = inlined_call_operand.vmem [shape: f32[32,1], index: 8, kind: input, shape index: {}]
  %s9 = inlined_call_operand.vmem [shape: f32[2,32,512], index: 9, kind: output, shape index: {0}]
  %s10 = inlined_call_operand.vmem [shape: f32[2,128,1], index: 10, kind: output, shape index: {1}]
  %11 = xla_tuple %s9, %s10
  %s12 = sld [smem:[#allocation0]]
  $region77: #{_lambda_.1} parent=0
    _
  %s14 = ssub.s32 1, %s12
  %s15 = scalar_select 0, %s14, %s12
  loop: start=0, step=1, limit=4
  $region2: #{_lambda_.1} parent=0 // loop_pre_header
    _
  $region3: #{_lambda_.1} parent=0 // loop_header
    %s17 = sphi 0, %s21
    %p18 = scmp.ge.s32.totalorder %s17, 4
    %s27 = sphi 0, %s29
    %s30 = sphi 0, %s27
    %s31 = sphi 0, %s30
    %s47 = sphi 0, %s31
    %s51 = sphi 0, %s51
    %s53 = sphi 0, %s51
    %s54 = sphi 0, %s53
    %s68 = sphi 0, %s54
    %s72 = sphi 0, %s72
    %s74 = sphi 0, %s72
    %s75 = sphi 0, %s74
    %s89 = sphi 0, %s75
    %s93 = sphi 0, %s93
    %s95 = sphi 0, %s93
    %s96 = sphi 0, %s95
    %s110 = sphi 0, %s96
    %s114 = sphi 0, %s114
    %s116 = sphi 0, %s114
    %s117 = sphi 0, %s116
    %s131 = sphi 0, %s117
    %s135 = sphi 0, %s135
    %s137 = sphi 0, %s135
    %s138 = sphi 0, %s137
    %s152 = sphi 0, %s138
    %s156 = sphi 0, %s156
    %s158 = sphi 0, %s156
    %s159 = sphi 0, %s158
    %s173 = sphi 0, %s159
    %s177 = sphi 0, %s177
    %s179 = sphi 0, %s177
    %s180 = sphi 0, %s179
    %s194 = sphi 0, %s180
    %s198 = sphi 0, %s198
    %s200 = sphi 0, %s198
    %s201 = sphi 0, %s200
    %s215 = sphi 0, %s201
    %s221 = sphi 0, %s223
    %s224 = sphi 0, %s221
    %s225 = sphi 0, %s224
    %s241 = sphi 0, %s225
    %s247 = sphi 0, %s249
    %s250 = sphi 0, %s247
    %s251 = sphi 0, %s250
    %s267 = sphi 0, %s251
  $region4: #{_lambda_.1} parent=0 // loop_header_branch
    %20 = sbr.rel (%p18) target = $region8
  $region5: #{_lambda_.1} parent=0 // loop_body
    %s22 = ssub.s32 %s17, 1
    %s23 = ssub.s32 %s17, 2
    %s24 = sadd.s32 %s17, 1
    %s25 = ssub.s32 %s17, %s24
    %p26 = scmp.eq.s32.totalorder %s25, 0
    %s28 = sadd.s32 %s27, 1
    %s29 = scalar_select %p26, %s27, %s28
    %p32 = pneg %p26
    %p33 = scmp.eq.s32.totalorder %s17, 1
    %p34 = por %p32, %p33
    %p35 = scmp.ne.s32.totalorder %s27, %s30
    %p36 = scmp.eq.s32.totalorder %s17, 0
    %p37 = por %p35, %p36
    %p38 = scmp.ne.s32.totalorder %s27, %s30
    %p39 = scmp.eq.s32.totalorder %s22, 1
    %p40 = por %p38, %p39
    %p41 = scmp.ne.s32.totalorder %s30, %s31
    %p42 = scmp.eq.s32.totalorder %s22, 0
    %p43 = por %p41, %p42
    %p44 = scmp.ne.s32.totalorder %s30, %s31
    %p45 = scmp.eq.s32.totalorder %s23, 1
    %p46 = por %p44, %p45
    %p48 = scmp.ne.s32.totalorder %s31, %s47
    %p49 = scmp.eq.s32.totalorder %s23, 0
    %p50 = por %p48, %p49
    %s52 = sadd.s32 %s51, 1
    %p55 = scmp.eq.s32.totalorder %s17, 1
    %p56 = scmp.ne.s32.totalorder %s51, %s53
    %p57 = scmp.eq.s32.totalorder %s17, 0
    %p58 = por %p56, %p57
    %p59 = scmp.ne.s32.totalorder %s51, %s53
    %p60 = scmp.eq.s32.totalorder %s22, 1
    %p61 = por %p59, %p60
    %p62 = scmp.ne.s32.totalorder %s53, %s54
    %p63 = scmp.eq.s32.totalorder %s22, 0
    %p64 = por %p62, %p63
    %p65 = scmp.ne.s32.totalorder %s53, %s54
    %p66 = scmp.eq.s32.totalorder %s23, 1
    %p67 = por %p65, %p66
    %p69 = scmp.ne.s32.totalorder %s54, %s68
    %p70 = scmp.eq.s32.totalorder %s23, 0
    %p71 = por %p69, %p70
    %s73 = sadd.s32 %s72, 1
    %p76 = scmp.eq.s32.totalorder %s17, 1
    %p77 = scmp.ne.s32.totalorder %s72, %s74
    %p78 = scmp.eq.s32.totalorder %s17, 0
    %p79 = por %p77, %p78
    %p80 = scmp.ne.s32.totalorder %s72, %s74
    %p81 = scmp.eq.s32.totalorder %s22, 1
    %p82 = por %p80, %p81
    %p83 = scmp.ne.s32.totalorder %s74, %s75
    %p84 = scmp.eq.s32.totalorder %s22, 0
    %p85 = por %p83, %p84
    %p86 = scmp.ne.s32.totalorder %s74, %s75
    %p87 = scmp.eq.s32.totalorder %s23, 1
    %p88 = por %p86, %p87
    %p90 = scmp.ne.s32.totalorder %s75, %s89
    %p91 = scmp.eq.s32.totalorder %s23, 0
    %p92 = por %p90, %p91
    %s94 = sadd.s32 %s93, 1
    %p97 = scmp.eq.s32.totalorder %s17, 1
    %p98 = scmp.ne.s32.totalorder %s93, %s95
    %p99 = scmp.eq.s32.totalorder %s17, 0
    %p100 = por %p98, %p99
    %p101 = scmp.ne.s32.totalorder %s93, %s95
    %p102 = scmp.eq.s32.totalorder %s22, 1
    %p103 = por %p101, %p102
    %p104 = scmp.ne.s32.totalorder %s95, %s96
    %p105 = scmp.eq.s32.totalorder %s22, 0
    %p106 = por %p104, %p105
    %p107 = scmp.ne.s32.totalorder %s95, %s96
    %p108 = scmp.eq.s32.totalorder %s23, 1
    %p109 = por %p107, %p108
    %p111 = scmp.ne.s32.totalorder %s96, %s110
    %p112 = scmp.eq.s32.totalorder %s23, 0
    %p113 = por %p111, %p112
    %s115 = sadd.s32 %s114, 1
    %p118 = scmp.eq.s32.totalorder %s17, 1
    %p119 = scmp.ne.s32.totalorder %s114, %s116
    %p120 = scmp.eq.s32.totalorder %s17, 0
    %p121 = por %p119, %p120
    %p122 = scmp.ne.s32.totalorder %s114, %s116
    %p123 = scmp.eq.s32.totalorder %s22, 1
    %p124 = por %p122, %p123
    %p125 = scmp.ne.s32.totalorder %s116, %s117
    %p126 = scmp.eq.s32.totalorder %s22, 0
    %p127 = por %p125, %p126
    %p128 = scmp.ne.s32.totalorder %s116, %s117
    %p129 = scmp.eq.s32.totalorder %s23, 1
    %p130 = por %p128, %p129
    %p132 = scmp.ne.s32.totalorder %s117, %s131
    %p133 = scmp.eq.s32.totalorder %s23, 0
    %p134 = por %p132, %p133
    %s136 = sadd.s32 %s135, 1
    %p139 = scmp.eq.s32.totalorder %s17, 1
    %p140 = scmp.ne.s32.totalorder %s135, %s137
    %p141 = scmp.eq.s32.totalorder %s17, 0
    %p142 = por %p140, %p141
    %p143 = scmp.ne.s32.totalorder %s135, %s137
    %p144 = scmp.eq.s32.totalorder %s22, 1
    %p145 = por %p143, %p144
    %p146 = scmp.ne.s32.totalorder %s137, %s138
    %p147 = scmp.eq.s32.totalorder %s22, 0
    %p148 = por %p146, %p147
    %p149 = scmp.ne.s32.totalorder %s137, %s138
    %p150 = scmp.eq.s32.totalorder %s23, 1
    %p151 = por %p149, %p150
    %p153 = scmp.ne.s32.totalorder %s138, %s152
    %p154 = scmp.eq.s32.totalorder %s23, 0
    %p155 = por %p153, %p154
    %s157 = sadd.s32 %s156, 1
    %p160 = scmp.eq.s32.totalorder %s17, 1
    %p161 = scmp.ne.s32.totalorder %s156, %s158
    %p162 = scmp.eq.s32.totalorder %s17, 0
    %p163 = por %p161, %p162
    %p164 = scmp.ne.s32.totalorder %s156, %s158
    %p165 = scmp.eq.s32.totalorder %s22, 1
    %p166 = por %p164, %p165
    %p167 = scmp.ne.s32.totalorder %s158, %s159
    %p168 = scmp.eq.s32.totalorder %s22, 0
    %p169 = por %p167, %p168
    %p170 = scmp.ne.s32.totalorder %s158, %s159
    %p171 = scmp.eq.s32.totalorder %s23, 1
    %p172 = por %p170, %p171
    %p174 = scmp.ne.s32.totalorder %s159, %s173
    %p175 = scmp.eq.s32.totalorder %s23, 0
    %p176 = por %p174, %p175
    %s178 = sadd.s32 %s177, 1
    %p181 = scmp.eq.s32.totalorder %s17, 1
    %p182 = scmp.ne.s32.totalorder %s177, %s179
    %p183 = scmp.eq.s32.totalorder %s17, 0
    %p184 = por %p182, %p183
    %p185 = scmp.ne.s32.totalorder %s177, %s179
    %p186 = scmp.eq.s32.totalorder %s22, 1
    %p187 = por %p185, %p186
    %p188 = scmp.ne.s32.totalorder %s179, %s180
    %p189 = scmp.eq.s32.totalorder %s22, 0
    %p190 = por %p188, %p189
    %p191 = scmp.ne.s32.totalorder %s179, %s180
    %p192 = scmp.eq.s32.totalorder %s23, 1
    %p193 = por %p191, %p192
    %p195 = scmp.ne.s32.totalorder %s180, %s194
    %p196 = scmp.eq.s32.totalorder %s23, 0
    %p197 = por %p195, %p196
    %s199 = sadd.s32 %s198, 1
    %p202 = scmp.eq.s32.totalorder %s17, 1
    %p203 = scmp.ne.s32.totalorder %s198, %s200
    %p204 = scmp.eq.s32.totalorder %s17, 0
    %p205 = por %p203, %p204
    %p206 = scmp.ne.s32.totalorder %s198, %s200
    %p207 = scmp.eq.s32.totalorder %s22, 1
    %p208 = por %p206, %p207
    %p209 = scmp.ne.s32.totalorder %s200, %s201
    %p210 = scmp.eq.s32.totalorder %s22, 0
    %p211 = por %p209, %p210
    %p212 = scmp.ne.s32.totalorder %s200, %s201
    %p213 = scmp.eq.s32.totalorder %s23, 1
    %p214 = por %p212, %p213
    %p216 = scmp.ne.s32.totalorder %s201, %s215
    %p217 = scmp.eq.s32.totalorder %s23, 0
    %p218 = por %p216, %p217
    %s219 = ssub.s32 %s17, %s24
    %p220 = scmp.eq.s32.totalorder %s219, 0
    %s222 = sadd.s32 %s221, 1
    %s223 = scalar_select %p220, %s221, %s222
    %p226 = pneg %p220
    %p227 = scmp.eq.s32.totalorder %s17, 1
    %p228 = por %p226, %p227
    %p229 = scmp.ne.s32.totalorder %s221, %s224
    %p230 = scmp.eq.s32.totalorder %s17, 0
    %p231 = por %p229, %p230
    %p232 = scmp.ne.s32.totalorder %s221, %s224
    %p233 = scmp.eq.s32.totalorder %s22, 1
    %p234 = por %p232, %p233
    %p235 = scmp.ne.s32.totalorder %s224, %s225
    %p236 = scmp.eq.s32.totalorder %s22, 0
    %p237 = por %p235, %p236
    %p238 = scmp.ne.s32.totalorder %s224, %s225
    %p239 = scmp.eq.s32.totalorder %s23, 1
    %p240 = por %p238, %p239
    %p242 = scmp.ne.s32.totalorder %s225, %s241
    %p243 = scmp.eq.s32.totalorder %s23, 0
    %p244 = por %p242, %p243
    %s245 = ssub.s32 %s17, %s24
    %p246 = scmp.eq.s32.totalorder %s245, 0
    %s248 = sadd.s32 %s247, 1
    %s249 = scalar_select %p246, %s247, %s248
    %p252 = pneg %p246
    %p253 = scmp.eq.s32.totalorder %s17, 1
    %p254 = por %p252, %p253
    %p255 = scmp.ne.s32.totalorder %s247, %s250
    %p256 = scmp.eq.s32.totalorder %s17, 0
    %p257 = por %p255, %p256
    %p258 = scmp.ne.s32.totalorder %s247, %s250
    %p259 = scmp.eq.s32.totalorder %s22, 1
    %p260 = por %p258, %p259
    %p261 = scmp.ne.s32.totalorder %s250, %s251
    %p262 = scmp.eq.s32.totalorder %s22, 0
    %p263 = por %p261, %p262
    %p264 = scmp.ne.s32.totalorder %s250, %s251
    %p265 = scmp.eq.s32.totalorder %s23, 1
    %p266 = por %p264, %p265
    %p268 = scmp.ne.s32.totalorder %s251, %s267
    %p269 = scmp.eq.s32.totalorder %s23, 0
    %p270 = por %p268, %p269
    %p271 = scmp.le.s32.totalorder 1, %s17
    %p272 = scmp.lt.s32.totalorder %s17, 3
    %p273 = pnand %p271, %p272
    %p274 = pneg %p273
    // Predicated region
    $region9: #{_lambda_.1} parent=5 // pred_check
      _
    $region10: #{_lambda_.1} parent=5 // pred_check_branch
      %276 = sbr.rel (%p273) target = $region12
    $region11: #{_lambda_.1} parent=5 // pred_region
      %s277 = ssub.s32 %s17, 1
      // Predicated region
      $region13: #{_lambda_.1} parent=11 // pred_check
        %p278 = pneg %p64
      $region14: #{_lambda_.1} parent=11 // pred_check_branch
        %280 = sbr.rel (%p278) target = $region16
      $region15: #{_lambda_.1} parent=11 // pred_region
        _
      $region16: #{_lambda_.1} parent=11 // pred_fallthru
        _
      // Predicated region
      $region17: #{_lambda_.1} parent=11 // pred_check
        %p281 = pneg %p85
      $region18: #{_lambda_.1} parent=11 // pred_check_branch
        %283 = sbr.rel (%p281) target = $region20
      $region19: #{_lambda_.1} parent=11 // pred_region
        _
      $region20: #{_lambda_.1} parent=11 // pred_fallthru
        _
      // Predicated region
      $region21: #{_lambda_.1} parent=11 // pred_check
        %p284 = pneg %p106
      $region22: #{_lambda_.1} parent=11 // pred_check_branch
        %286 = sbr.rel (%p284) target = $region24
      $region23: #{_lambda_.1} parent=11 // pred_region
        _
      $region24: #{_lambda_.1} parent=11 // pred_fallthru
        _
      // Predicated region
      $region25: #{_lambda_.1} parent=11 // pred_check
        %p287 = pneg %p127
      $region26: #{_lambda_.1} parent=11 // pred_check_branch
        %289 = sbr.rel (%p287) target = $region28
      $region27: #{_lambda_.1} parent=11 // pred_region
        _
      $region28: #{_lambda_.1} parent=11 // pred_fallthru
        _
      // Predicated region
      $region29: #{_lambda_.1} parent=11 // pred_check
        %p290 = pneg %p148
      $region30: #{_lambda_.1} parent=11 // pred_check_branch
        %292 = sbr.rel (%p290) target = $region32
      $region31: #{_lambda_.1} parent=11 // pred_region
        _
      $region32: #{_lambda_.1} parent=11 // pred_fallthru
        _
      // Predicated region
      $region33: #{_lambda_.1} parent=11 // pred_check
        %p293 = pneg %p169
      $region34: #{_lambda_.1} parent=11 // pred_check_branch
        %295 = sbr.rel (%p293) target = $region36
      $region35: #{_lambda_.1} parent=11 // pred_region
        _
      $region36: #{_lambda_.1} parent=11 // pred_fallthru
        _
      // Predicated region
      $region37: #{_lambda_.1} parent=11 // pred_check
        %p296 = pneg %p190
      $region38: #{_lambda_.1} parent=11 // pred_check_branch
        %298 = sbr.rel (%p296) target = $region40
      $region39: #{_lambda_.1} parent=11 // pred_region
        _
      $region40: #{_lambda_.1} parent=11 // pred_fallthru
        _
      // Predicated region
      $region41: #{_lambda_.1} parent=11 // pred_check
        %p299 = pneg %p211
      $region42: #{_lambda_.1} parent=11 // pred_check_branch
        %301 = sbr.rel (%p299) target = $region44
      $region43: #{_lambda_.1} parent=11 // pred_region
        _
      $region44: #{_lambda_.1} parent=11 // pred_fallthru
        _
    $region12: #{_lambda_.1} parent=5 // pred_fallthru
      _
    %p302 = scmp.lt.s32.totalorder %s17, 2
    // Predicated region
    $region45: #{_lambda_.1} parent=5 // pred_check
      %p303 = pneg %p302
    $region46: #{_lambda_.1} parent=5 // pred_check_branch
      %305 = sbr.rel (%p303) target = $region48
    $region47: #{_lambda_.1} parent=5 // pred_region
      // Predicated region
      $region49: #{_lambda_.1} parent=47 // pred_check
        %p306 = pneg %p37
      $region50: #{_lambda_.1} parent=47 // pred_check_branch
        %308 = sbr.rel (%p306) target = $region52
      $region51: #{_lambda_.1} parent=47 // pred_region
        %p309 = scmp.lt.s32.totalorder %s17, 1
        %s310 = scalar_select %p309, %s17, 1
        %s311 = smul.addr %s310, 32
        %s312 = smul.addr %s311, 8
        %s313 = scalar_lea.vmem %s0, %s312
      $region52: #{_lambda_.1} parent=47 // pred_fallthru
        _
    $region48: #{_lambda_.1} parent=5 // pred_fallthru
      _
    %p314 = scmp.le.s32.totalorder 1, %s17
    %p315 = scmp.lt.s32.totalorder %s17, 3
    %p316 = pnand %p314, %p315
    %p317 = pneg %p316
    // Predicated region
    $region53: #{_lambda_.1} parent=5 // pred_check
      _
    $region54: #{_lambda_.1} parent=5 // pred_check_branch
      %319 = sbr.rel (%p316) target = $region56
    $region55: #{_lambda_.1} parent=5 // pred_region
      %s320 = ssub.s32 %s17, 1
      %p321 = scmp.lt.s32.totalorder %s22, 1
      %s322 = scalar_select %p321, %s22, 1
      %s323 = smul.addr %s322, 32
      %s324 = smul.addr %s323, 8
      %s325 = scalar_lea.vmem %s0, %s324
      %p326 = pneg %p43
      %p327 = pneg %p40
      %p328 = pneg %p64
      %p329 = pneg %p61
      %p330 = pneg %p85
      %p331 = pneg %p82
      %p332 = pneg %p106
      %p333 = pneg %p103
      %p334 = pneg %p127
      %p335 = pneg %p124
      %p336 = pneg %p148
      %p337 = pneg %p145
      %p338 = pneg %p169
      %p339 = pneg %p166
      %p340 = pneg %p190
      %p341 = pneg %p187
      %p342 = pneg %p211
      %p343 = pneg %p208
      %p344 = pneg %p237
      %p345 = pneg %p234
      %p346 = scmp.lt.s32.totalorder %s22, 1
      %s347 = scalar_select %p346, %s22, 1
      %s348 = smul.addr %s347, 16
      %s349 = smul.addr %s348, 8
      %s350 = scalar_lea.vmem %s9, %s349
      %p351 = pneg %p263
      %p352 = pneg %p260
      %p353 = scmp.lt.s32.totalorder %s22, 1
      %s354 = scalar_select %p353, %s22, 1
      %s355 = smul.addr %s354, 16
      %s356 = smul.addr %s355, 8
      %s357 = scalar_lea.vmem %s10, %s356
      %p358 = scmp.lt.s32.totalorder %s22, 1
      %s359 = scalar_select %p358, %s22, 1
      %s360 = smul.addr %s359, 32
      %s361 = smul.addr %s360, 8
      %s362 = scalar_lea.vmem %s0, %s361
      %p363 = scmp.lt.s32.totalorder %s22, 1
      %s364 = scalar_select %p363, %s22, 1
      %s365 = smul.addr %s364, 16
      %s366 = smul.addr %s365, 8
      %s367 = scalar_lea.vmem %s9, %s366
      %p368 = scmp.lt.s32.totalorder %s22, 1
      %s369 = scalar_select %p368, %s22, 1
      %s370 = smul.addr %s369, 16
      %s371 = smul.addr %s370, 8
      %s372 = scalar_lea.vmem %s10, %s371
      %v374 = vld [vmem:[%s362] sm:$0xff]
      %v375 = vld [vmem:[%s362 + $0x8] sm:$0xff]
      %v376 = vld [vmem:[%s362 + $0x10] sm:$0xff]
      %v377 = vld [vmem:[%s362 + $0x18] sm:$0xff]
      %v378 = vld [vmem:[%s362 + $0x20] sm:$0xff]
      %v379 = vld [vmem:[%s362 + $0x28] sm:$0xff]
      %v380 = vld [vmem:[%s362 + $0x30] sm:$0xff]
      %v381 = vld [vmem:[%s362 + $0x38] sm:$0xff]
      %v382 = vld [vmem:[%s362 + $0x40] sm:$0xff]
      %v383 = vld [vmem:[%s362 + $0x48] sm:$0xff]
      %v384 = vld [vmem:[%s362 + $0x50] sm:$0xff]
      %v385 = vld [vmem:[%s362 + $0x58] sm:$0xff]
      %v386 = vld [vmem:[%s362 + $0x60] sm:$0xff]
      %v387 = vld [vmem:[%s362 + $0x68] sm:$0xff]
      %v388 = vld [vmem:[%s362 + $0x70] sm:$0xff]
      %v389 = vld [vmem:[%s362 + $0x78] sm:$0xff]
      %v390 = vld [vmem:[%s362 + $0x80] sm:$0xff]
      %v391 = vld [vmem:[%s362 + $0x88] sm:$0xff]
      %v392 = vld [vmem:[%s362 + $0x90] sm:$0xff]
      %v393 = vld [vmem:[%s362 + $0x98] sm:$0xff]
      %v394 = vld [vmem:[%s362 + $0xa0] sm:$0xff]
      %v395 = vld [vmem:[%s362 + $0xa8] sm:$0xff]
      %v396 = vld [vmem:[%s362 + $0xb0] sm:$0xff]
      %v397 = vld [vmem:[%s362 + $0xb8] sm:$0xff]
      %v398 = vld [vmem:[%s362 + $0xc0] sm:$0xff]
      %v399 = vld [vmem:[%s362 + $0xc8] sm:$0xff]
      %v400 = vld [vmem:[%s362 + $0xd0] sm:$0xff]
      %v401 = vld [vmem:[%s362 + $0xd8] sm:$0xff]
      %v402 = vld [vmem:[%s362 + $0xe0] sm:$0xff]
      %v403 = vld [vmem:[%s362 + $0xe8] sm:$0xff]
      %v404 = vld [vmem:[%s362 + $0xf0] sm:$0xff]
      %v405 = vld [vmem:[%s362 + $0xf8] sm:$0xff]
      %v406 = vlaneseq
      %v407 = vand.u32 %v406, 127
      %v408 = vadd.s32 %v407, 128
      %v409 = vadd.s32 %v407, 256
      %v410 = vadd.s32 %v407, 384
      %v411 = vand.u32 %v407, 127
      %v412 = vand.u32 %v408, 127
      %v413 = vand.u32 %v409, 127
      %v414 = vand.u32 %v410, 127
      %v415 = vpack.c.bf16 %v378, %v374
      %v416 = vpack.c.bf16 %v379, %v375
      %v417 = vpack.c.bf16 %v380, %v376
      %v418 = vpack.c.bf16 %v381, %v377
      %v419 = vpack.c.bf16 %v386, %v382
      %v420 = vpack.c.bf16 %v387, %v383
      %v421 = vpack.c.bf16 %v388, %v384
      %v422 = vpack.c.bf16 %v389, %v385
      %v423 = vpack.c.bf16 %v394, %v390
      %v424 = vpack.c.bf16 %v395, %v391
      %v425 = vpack.c.bf16 %v396, %v392
      %v426 = vpack.c.bf16 %v397, %v393
      %v427 = vpack.c.bf16 %v402, %v398
      %v428 = vpack.c.bf16 %v403, %v399
      %v429 = vpack.c.bf16 %v404, %v400
      %v430 = vpack.c.bf16 %v405, %v401
      %v431 = vld [vmem:[%s2] sm:$0xf]
      %v432 = vld [vmem:[%s2 + $0x4] sm:$0xf]
      %v433 = vld [vmem:[%s2 + $0x8] sm:$0xf]
      %v434 = vld [vmem:[%s2 + $0xc] sm:$0xf]
      %v435 = vld [vmem:[%s2 + $0x10] sm:$0xf]
      %v436 = vld [vmem:[%s2 + $0x14] sm:$0xf]
      %v437 = vld [vmem:[%s2 + $0x18] sm:$0xf]
      %v438 = vld [vmem:[%s2 + $0x1c] sm:$0xf]
      %v439 = vld [vmem:[%s3] sm:$0xff]
      %v440 = vld [vmem:[%s3 + $0x8] sm:$0xff]
      %v441 = vld [vmem:[%s3 + $0x10] sm:$0xff]
      %v442 = vld [vmem:[%s3 + $0x18] sm:$0xff]
      %v443 = vld [vmem:[%s3 + $0x20] sm:$0xff]
      %v444 = vld [vmem:[%s3 + $0x28] sm:$0xff]
      %v445 = vld [vmem:[%s3 + $0x30] sm:$0xff]
      %v446 = vld [vmem:[%s3 + $0x38] sm:$0xff]
      %448 = vset.pattern.permute.xlu0 0
      %449 = vperm.xlu0 %448, %v439
      %v450 = vpop.permute.xlu0 %449
      %453 = vset.pattern.permute.xlu0 0
      %454 = vperm.xlu0 %453, %v440
      %v455 = vpop.permute.xlu0 %454
      %458 = vset.pattern.permute.xlu0 0
      %459 = vperm.xlu0 %458, %v441
      %v460 = vpop.permute.xlu0 %459
      %463 = vset.pattern.permute.xlu0 0
      %464 = vperm.xlu0 %463, %v442
      %v465 = vpop.permute.xlu0 %464
      %468 = vset.pattern.permute.xlu0 0
      %469 = vperm.xlu0 %468, %v443
      %v470 = vpop.permute.xlu0 %469
      %473 = vset.pattern.permute.xlu0 0
      %474 = vperm.xlu0 %473, %v444
      %v475 = vpop.permute.xlu0 %474
      %478 = vset.pattern.permute.xlu0 0
      %479 = vperm.xlu0 %478, %v445
      %v480 = vpop.permute.xlu0 %479
      %483 = vset.pattern.permute.xlu0 0
      %484 = vperm.xlu0 %483, %v446
      %v485 = vpop.permute.xlu0 %484
      %v495 = vunpack.c.l.b16 %v431
      %v496 = vunpack.c.l.b16 %v432
      %v497 = vunpack.c.l.b16 %v433
      %v498 = vunpack.c.l.b16 %v434
      %v499 = vunpack.c.l.b16 %v435
      %v500 = vunpack.c.l.b16 %v436
      %v501 = vunpack.c.l.b16 %v437
      %v502 = vunpack.c.l.b16 %v438
      %v503 = vpack.c.b16 %v496, %v495
      %v504 = vpack.c.b16 %v498, %v497
      %v505 = vpack.c.b16 %v500, %v499
      %v506 = vpack.c.b16 %v502, %v501
      %vm507 = vcmask 523264
      %v509 = vsel %vm507, %v503, 0
      %v512 = vsel %vm507, %v504, 0
      %v515 = vsel %vm507, %v505, 0
      %v518 = vsel %vm507, %v506, 0
      %520 = vmatprep.subr.bf16.mxu0 %v416
      %521 = vmatpush1.bf16.msra.mxu0 %v415
      %522 = vmatprep.subr.bf16.mxu0 %v420
      %523 = vmatpush1.bf16.msra.mxu0 %v419
      %524 = vmatprep.subr.bf16.mxu0 %v424
      %525 = vmatpush1.bf16.msra.mxu0 %v423
      %526 = vmatprep.subr.bf16.mxu0 %v428
      %527 = vmatpush1.bf16.msra.mxu0 %v427
      %528 = vmatprep.subr.bf16.mxu0 0
      %529 = vmatpush1.bf16.msra.mxu0 0
      %530 = vmatprep.subr.bf16.mxu0 0
      %531 = vmatpush1.bf16.msra.mxu0 0
      %532 = vmatprep.subr.bf16.mxu0 0
      %533 = vmatpush1.bf16.msra.mxu0 0
      %534 = vmatprep.subr.bf16.mxu0 0
      %535 = vmatpush1.bf16.msra.mxu0 0
      %536 = vmatprep.subr.bf16.mxu0 0
      %537 = vmatpush1.bf16.msra.mxu0 0
      %538 = vmatprep.subr.bf16.mxu0 0
      %539 = vmatpush1.bf16.msra.mxu0 0
      %540 = vmatprep.subr.bf16.mxu0 0
      %541 = vmatpush1.bf16.msra.mxu0 0
      %542 = vmatprep.subr.bf16.mxu0 0
      %543 = vmatpush1.bf16.msra.mxu0 0
      %544 = vmatprep.subr.bf16.mxu0 0
      %545 = vmatpush1.bf16.msra.mxu0 0
      %546 = vmatprep.subr.bf16.mxu0 0
      %547 = vmatpush1.bf16.msra.mxu0 0
      %548 = vmatprep.subr.bf16.mxu0 0
      %549 = vmatpush1.bf16.msra.mxu0 0
      %550 = vmatprep.subr.bf16.mxu0 0
      %551 = vmatpush1.bf16.msra.mxu0 0
      %552 = vmatprep.mubr.bf16.mxu0 0
      %553 = vmatmul.mubr.bf16.gmra.mrb[0].mxu0 %v509
      %v554 = vpop.f32.mrb[0].mxu0
      %v555 = vadd.f32 %v450, %v554
      %v556 = vpop.f32.mrb[0].mxu0
      %v557 = vadd.f32 %v450, %v556
      %v558 = vpop.f32.mrb[0].mxu0
      %v559 = vadd.f32 %v455, %v558
      %v560 = vpop.f32.mrb[0].mxu0
      %v561 = vadd.f32 %v455, %v560
      %562 = vmatprep.mubr.bf16.mxu0 0
      %563 = vmatmul.mubr.bf16.gmra.mrb[0].mxu0 %v512
      %v564 = vpop.f32.mrb[0].mxu0
      %v565 = vadd.f32 %v460, %v564
      %v566 = vpop.f32.mrb[0].mxu0
      %v567 = vadd.f32 %v460, %v566
      %v568 = vpop.f32.mrb[0].mxu0
      %v569 = vadd.f32 %v465, %v568
      %v570 = vpop.f32.mrb[0].mxu0
      %v571 = vadd.f32 %v465, %v570
      %572 = vmatprep.mubr.bf16.mxu0 0
      %573 = vmatmul.mubr.bf16.gmra.mrb[0].mxu0 %v515
      %v574 = vpop.f32.mrb[0].mxu0
      %v575 = vadd.f32 %v470, %v574
      %v576 = vpop.f32.mrb[0].mxu0
      %v577 = vadd.f32 %v470, %v576
      %v578 = vpop.f32.mrb[0].mxu0
      %v579 = vadd.f32 %v475, %v578
      %v580 = vpop.f32.mrb[0].mxu0
      %v581 = vadd.f32 %v475, %v580
      %582 = vmatprep.mubr.bf16.mxu0 0
      %583 = vmatmul.mubr.bf16.gmra.mrb[0].mxu0 %v518
      %v584 = vpop.f32.mrb[0].mxu0
      %v585 = vadd.f32 %v480, %v584
      %v586 = vpop.f32.mrb[0].mxu0
      %v587 = vadd.f32 %v480, %v586
      %v588 = vpop.f32.mrb[0].mxu0
      %v589 = vadd.f32 %v485, %v588
      %v590 = vpop.f32.mrb[0].mxu0
      %v591 = vadd.f32 %v485, %v590
      %592 = vdwg.mxu0
      %593 = vmatprep.subr.bf16.mxu0 %v418
      %594 = vmatpush1.bf16.msra.mxu0 %v417
      %595 = vmatprep.subr.bf16.mxu0 %v422
      %596 = vmatpush1.bf16.msra.mxu0 %v421
      %597 = vmatprep.subr.bf16.mxu0 %v426
      %598 = vmatpush1.bf16.msra.mxu0 %v425
      %599 = vmatprep.subr.bf16.mxu0 %v430
      %600 = vmatpush1.bf16.msra.mxu0 %v429
      %601 = vmatprep.subr.bf16.mxu0 0
      %602 = vmatpush1.bf16.msra.mxu0 0
      %603 = vmatprep.subr.bf16.mxu0 0
      %604 = vmatpush1.bf16.msra.mxu0 0
      %605 = vmatprep.subr.bf16.mxu0 0
      %606 = vmatpush1.bf16.msra.mxu0 0
      %607 = vmatprep.subr.bf16.mxu0 0
      %608 = vmatpush1.bf16.msra.mxu0 0
      %609 = vmatprep.subr.bf16.mxu0 0
      %610 = vmatpush1.bf16.msra.mxu0 0
      %611 = vmatprep.subr.bf16.mxu0 0
      %612 = vmatpush1.bf16.msra.mxu0 0
      %613 = vmatprep.subr.bf16.mxu0 0
      %614 = vmatpush1.bf16.msra.mxu0 0
      %615 = vmatprep.subr.bf16.mxu0 0
      %616 = vmatpush1.bf16.msra.mxu0 0
      %617 = vmatprep.subr.bf16.mxu0 0
      %618 = vmatpush1.bf16.msra.mxu0 0
      %619 = vmatprep.subr.bf16.mxu0 0
      %620 = vmatpush1.bf16.msra.mxu0 0
      %621 = vmatprep.subr.bf16.mxu0 0
      %622 = vmatpush1.bf16.msra.mxu0 0
      %623 = vmatprep.subr.bf16.mxu0 0
      %624 = vmatpush1.bf16.msra.mxu0 0
      %625 = vmatprep.mubr.bf16.mxu0 0
      %626 = vmatmul.mubr.bf16.gmra.mrb[0].mxu0 %v509
      %v627 = vpop.f32.mrb[0].mxu0
      %v628 = vadd.f32 %v450, %v627
      %v629 = vpop.f32.mrb[0].mxu0
      %v630 = vadd.f32 %v450, %v629
      %v631 = vpop.f32.mrb[0].mxu0
      %v632 = vadd.f32 %v455, %v631
      %v633 = vpop.f32.mrb[0].mxu0
      %v634 = vadd.f32 %v455, %v633
      %635 = vmatprep.mubr.bf16.mxu0 0
      %636 = vmatmul.mubr.bf16.gmra.mrb[0].mxu0 %v512
      %v637 = vpop.f32.mrb[0].mxu0
      %v638 = vadd.f32 %v460, %v637
      %v639 = vpop.f32.mrb[0].mxu0
      %v640 = vadd.f32 %v460, %v639
      %v641 = vpop.f32.mrb[0].mxu0
      %v642 = vadd.f32 %v465, %v641
      %v643 = vpop.f32.mrb[0].mxu0
      %v644 = vadd.f32 %v465, %v643
      %645 = vmatprep.mubr.bf16.mxu0 0
      %646 = vmatmul.mubr.bf16.gmra.mrb[0].mxu0 %v515
      %v647 = vpop.f32.mrb[0].mxu0
      %v648 = vadd.f32 %v470, %v647
      %v649 = vpop.f32.mrb[0].mxu0
      %v650 = vadd.f32 %v470, %v649
      %v651 = vpop.f32.mrb[0].mxu0
      %v652 = vadd.f32 %v475, %v651
      %v653 = vpop.f32.mrb[0].mxu0
      %v654 = vadd.f32 %v475, %v653
      %655 = vmatprep.mubr.bf16.mxu0 0
      %656 = vmatmul.mubr.bf16.gmra.mrb[0].mxu0 %v518
      %v657 = vpop.f32.mrb[0].mxu0
      %v658 = vadd.f32 %v480, %v657
      %v659 = vpop.f32.mrb[0].mxu0
      %v660 = vadd.f32 %v480, %v659
      %v661 = vpop.f32.mrb[0].mxu0
      %v662 = vadd.f32 %v485, %v661
      %v663 = vpop.f32.mrb[0].mxu0
      %v664 = vadd.f32 %v485, %v663
      %665 = vdwg.mxu0
      %v666 = vld [vmem:[%s1] sm:$0xf]
      %v667 = vld [vmem:[%s1 + $0x4] sm:$0xf]
      %v668 = vld [vmem:[%s1 + $0x8] sm:$0xf]
      %v669 = vld [vmem:[%s1 + $0xc] sm:$0xf]
      %vm670 = vcmp.ge.s32.totalorder %v411, 1
      %vm671 = vcmp.ge.s32.totalorder %v412, 1
      %vm672 = vcmp.ge.s32.totalorder %v413, 1
      %vm673 = vcmp.ge.s32.totalorder %v414, 1
      %v674 = vsel %vm670, 1, 0
      %v675 = vsel %vm671, 1, 0
      %v676 = vsel %vm672, 1, 0
      %v677 = vsel %vm673, 1, 0
      %v678 = vcvt.s32.f32 %v674
      %v679 = vcvt.s32.f32 %v675
      %v680 = vcvt.s32.f32 %v676
      %v681 = vcvt.s32.f32 %v677
      %682 = vrot.lane.b32.xlu0 %v374, 1
      %v683 = vpop.permute.xlu0 %682
      %684 = vrot.lane.b32.xlu0 %v378, 1
      %v685 = vpop.permute.xlu0 %684
      %686 = vrot.lane.b32.xlu0 %v382, 1
      %v687 = vpop.permute.xlu0 %686
      %688 = vrot.lane.b32.xlu0 %v386, 1
      %v689 = vpop.permute.xlu0 %688
      %690 = vrot.lane.b32.xlu0 %v390, 1
      %v691 = vpop.permute.xlu0 %690
      %692 = vrot.lane.b32.xlu0 %v394, 1
      %v693 = vpop.permute.xlu0 %692
      %694 = vrot.lane.b32.xlu0 %v398, 1
      %v695 = vpop.permute.xlu0 %694
      %696 = vrot.lane.b32.xlu0 %v402, 1
      %v697 = vpop.permute.xlu0 %696
      %698 = vrot.lane.b32.xlu0 %v375, 1
      %v699 = vpop.permute.xlu0 %698
      %700 = vrot.lane.b32.xlu0 %v379, 1
      %v701 = vpop.permute.xlu0 %700
      %702 = vrot.lane.b32.xlu0 %v383, 1
      %v703 = vpop.permute.xlu0 %702
      %704 = vrot.lane.b32.xlu0 %v387, 1
      %v705 = vpop.permute.xlu0 %704
      %706 = vrot.lane.b32.xlu0 %v391, 1
      %v707 = vpop.permute.xlu0 %706
      %708 = vrot.lane.b32.xlu0 %v395, 1
      %v709 = vpop.permute.xlu0 %708
      %710 = vrot.lane.b32.xlu0 %v399, 1
      %v711 = vpop.permute.xlu0 %710
      %712 = vrot.lane.b32.xlu0 %v403, 1
      %v713 = vpop.permute.xlu0 %712
      %714 = vrot.lane.b32.xlu0 %v376, 1
      %v715 = vpop.permute.xlu0 %714
      %716 = vrot.lane.b32.xlu0 %v380, 1
      %v717 = vpop.permute.xlu0 %716
      %718 = vrot.lane.b32.xlu0 %v384, 1
      %v719 = vpop.permute.xlu0 %718
      %720 = vrot.lane.b32.xlu0 %v388, 1
      %v721 = vpop.permute.xlu0 %720
      %722 = vrot.lane.b32.xlu0 %v392, 1
      %v723 = vpop.permute.xlu0 %722
      %724 = vrot.lane.b32.xlu0 %v396, 1
      %v725 = vpop.permute.xlu0 %724
      %726 = vrot.lane.b32.xlu0 %v400, 1
      %v727 = vpop.permute.xlu0 %726
      %728 = vrot.lane.b32.xlu0 %v404, 1
      %v729 = vpop.permute.xlu0 %728
      %730 = vrot.lane.b32.xlu0 %v377, 1
      %v731 = vpop.permute.xlu0 %730
      %732 = vrot.lane.b32.xlu0 %v381, 1
      %v733 = vpop.permute.xlu0 %732
      %734 = vrot.lane.b32.xlu0 %v385, 1
      %v735 = vpop.permute.xlu0 %734
      %736 = vrot.lane.b32.xlu0 %v389, 1
      %v737 = vpop.permute.xlu0 %736
      %738 = vrot.lane.b32.xlu0 %v393, 1
      %v739 = vpop.permute.xlu0 %738
      %740 = vrot.lane.b32.xlu0 %v397, 1
      %v741 = vpop.permute.xlu0 %740
      %742 = vrot.lane.b32.xlu0 %v401, 1
      %v743 = vpop.permute.xlu0 %742
      %744 = vrot.lane.b32.xlu0 %v405, 1
      %v745 = vpop.permute.xlu0 %744
      %vm746 = vcmp.lt.s32.totalorder %v407, 1
      %v747 = vsel %vm746, %v715, %v731
      %v748 = vsel %vm746, %v717, %v733
      %v749 = vsel %vm746, %v719, %v735
      %v750 = vsel %vm746, %v721, %v737
      %v751 = vsel %vm746, %v723, %v739
      %v752 = vsel %vm746, %v725, %v741
      %v753 = vsel %vm746, %v727, %v743
      %v754 = vsel %vm746, %v729, %v745
      %v755 = vsel %vm746, %v699, %v715
      %v756 = vsel %vm746, %v701, %v717
      %v757 = vsel %vm746, %v703, %v719
      %v758 = vsel %vm746, %v705, %v721
      %v759 = vsel %vm746, %v707, %v723
      %v760 = vsel %vm746, %v709, %v725
      %v761 = vsel %vm746, %v711, %v727
      %v762 = vsel %vm746, %v713, %v729
      %v763 = vsel %vm746, %v683, %v699
      %v764 = vsel %vm746, %v685, %v701
      %v765 = vsel %vm746, %v687, %v703
      %v766 = vsel %vm746, %v689, %v705
      %v767 = vsel %vm746, %v691, %v707
      %v768 = vsel %vm746, %v693, %v709
      %v769 = vsel %vm746, %v695, %v711
      %v770 = vsel %vm746, %v697, %v713
      %v771 = vsel %vm746, %v731, %v683
      %v772 = vsel %vm746, %v733, %v685
      %v773 = vsel %vm746, %v735, %v687
      %v774 = vsel %vm746, %v737, %v689
      %v775 = vsel %vm746, %v739, %v691
      %v776 = vsel %vm746, %v741, %v693
      %v777 = vsel %vm746, %v743, %v695
      %v778 = vsel %vm746, %v745, %v697
      %v779 = vmul.f32 %v771, %v678
      %v780 = vmul.f32 %v763, %v679
      %v781 = vmul.f32 %v755, %v680
      %v782 = vmul.f32 %v747, %v681
      %v783 = vmul.f32 %v772, %v678
      %v784 = vmul.f32 %v764, %v679
      %v785 = vmul.f32 %v756, %v680
      %v786 = vmul.f32 %v748, %v681
      %v787 = vmul.f32 %v773, %v678
      %v788 = vmul.f32 %v765, %v679
      %v789 = vmul.f32 %v757, %v680
      %v790 = vmul.f32 %v749, %v681
      %v791 = vmul.f32 %v774, %v678
      %v792 = vmul.f32 %v766, %v679
      %v793 = vmul.f32 %v758, %v680
      %v794 = vmul.f32 %v750, %v681
      %v795 = vmul.f32 %v775, %v678
      %v796 = vmul.f32 %v767, %v679
      %v797 = vmul.f32 %v759, %v680
      %v798 = vmul.f32 %v751, %v681
      %v799 = vmul.f32 %v776, %v678
      %v800 = vmul.f32 %v768, %v679
      %v801 = vmul.f32 %v760, %v680
      %v802 = vmul.f32 %v752, %v681
      %v803 = vmul.f32 %v777, %v678
      %v804 = vmul.f32 %v769, %v679
      %v805 = vmul.f32 %v761, %v680
      %v806 = vmul.f32 %v753, %v681
      %v807 = vmul.f32 %v778, %v678
      %v808 = vmul.f32 %v770, %v679
      %v809 = vmul.f32 %v762, %v680
      %v810 = vmul.f32 %v754, %v681
      %v811 = vpack.c.bf16 %v783, %v779
      %v812 = vpack.c.bf16 %v784, %v780
      %v813 = vpack.c.bf16 %v785, %v781
      %v814 = vpack.c.bf16 %v786, %v782
      %v815 = vpack.c.bf16 %v791, %v787
      %v816 = vpack.c.bf16 %v792, %v788
      %v817 = vpack.c.bf16 %v793, %v789
      %v818 = vpack.c.bf16 %v794, %v790
      %v819 = vpack.c.bf16 %v799, %v795
      %v820 = vpack.c.bf16 %v800, %v796
      %v821 = vpack.c.bf16 %v801, %v797
      %v822 = vpack.c.bf16 %v802, %v798
      %v823 = vpack.c.bf16 %v807, %v803
      %v824 = vpack.c.bf16 %v808, %v804
      %v825 = vpack.c.bf16 %v809, %v805
      %v826 = vpack.c.bf16 %v810, %v806
      %v831 = vunpack.c.l.b16 %v666
      %v832 = vunpack.c.l.b16 %v667
      %v833 = vunpack.c.l.b16 %v668
      %v834 = vunpack.c.l.b16 %v669
      %v835 = vpack.c.b16 %v832, %v831
      %v836 = vpack.c.b16 %v834, %v833
      %v838 = vsel %vm507, %v835, 0
      %v841 = vsel %vm507, %v836, 0
      %843 = vmatprep.subr.bf16.mxu0 %v812
      %844 = vmatpush1.bf16.msra.mxu0 %v811
      %845 = vmatprep.subr.bf16.mxu0 %v816
      %846 = vmatpush1.bf16.msra.mxu0 %v815
      %847 = vmatprep.subr.bf16.mxu0 %v820
      %848 = vmatpush1.bf16.msra.mxu0 %v819
      %849 = vmatprep.subr.bf16.mxu0 %v824
      %850 = vmatpush1.bf16.msra.mxu0 %v823
      %851 = vmatprep.subr.bf16.mxu0 0
      %852 = vmatpush1.bf16.msra.mxu0 0
      %853 = vmatprep.subr.bf16.mxu0 0
      %854 = vmatpush1.bf16.msra.mxu0 0
      %855 = vmatprep.subr.bf16.mxu0 0
      %856 = vmatpush1.bf16.msra.mxu0 0
      %857 = vmatprep.subr.bf16.mxu0 0
      %858 = vmatpush1.bf16.msra.mxu0 0
      %859 = vmatprep.subr.bf16.mxu0 0
      %860 = vmatpush1.bf16.msra.mxu0 0
      %861 = vmatprep.subr.bf16.mxu0 0
      %862 = vmatpush1.bf16.msra.mxu0 0
      %863 = vmatprep.subr.bf16.mxu0 0
      %864 = vmatpush1.bf16.msra.mxu0 0
      %865 = vmatprep.subr.bf16.mxu0 0
      %866 = vmatpush1.bf16.msra.mxu0 0
      %867 = vmatprep.subr.bf16.mxu0 0
      %868 = vmatpush1.bf16.msra.mxu0 0
      %869 = vmatprep.subr.bf16.mxu0 0
      %870 = vmatpush1.bf16.msra.mxu0 0
      %871 = vmatprep.subr.bf16.mxu0 0
      %872 = vmatpush1.bf16.msra.mxu0 0
      %873 = vmatprep.subr.bf16.mxu0 0
      %874 = vmatpush1.bf16.msra.mxu0 0
      %875 = vmatprep.mubr.bf16.mxu0 0
      %876 = vmatmul.mubr.bf16.gmra.mrb[0].mxu0 %v838
      %v877 = vpop.f32.mrb[0].mxu0
      %v878 = vadd.f32 0.0, %v877
      %v879 = vpop.f32.mrb[0].mxu0
      %v880 = vadd.f32 0.0, %v879
      %v881 = vpop.f32.mrb[0].mxu0
      %v882 = vadd.f32 0.0, %v881
      %v883 = vpop.f32.mrb[0].mxu0
      %v884 = vadd.f32 0.0, %v883
      %885 = vmatprep.mubr.bf16.mxu0 0
      %886 = vmatmul.mubr.bf16.gmra.mrb[0].mxu0 %v841
      %v887 = vpop.f32.mrb[0].mxu0
      %v888 = vadd.f32 0.0, %v887
      %v889 = vpop.f32.mrb[0].mxu0
      %v890 = vadd.f32 0.0, %v889
      %v891 = vpop.f32.mrb[0].mxu0
      %v892 = vadd.f32 0.0, %v891
      %v893 = vpop.f32.mrb[0].mxu0
      %v894 = vadd.f32 0.0, %v893
      %895 = vdwg.mxu0
      %896 = vmatprep.subr.bf16.mxu0 %v814
      %897 = vmatpush1.bf16.msra.mxu0 %v813
      %898 = vmatprep.subr.bf16.mxu0 %v818
      %899 = vmatpush1.bf16.msra.mxu0 %v817
      %900 = vmatprep.subr.bf16.mxu0 %v822
      %901 = vmatpush1.bf16.msra.mxu0 %v821
      %902 = vmatprep.subr.bf16.mxu0 %v826
      %903 = vmatpush1.bf16.msra.mxu0 %v825
      %904 = vmatprep.subr.bf16.mxu0 0
      %905 = vmatpush1.bf16.msra.mxu0 0
      %906 = vmatprep.subr.bf16.mxu0 0
      %907 = vmatpush1.bf16.msra.mxu0 0
      %908 = vmatprep.subr.bf16.mxu0 0
      %909 = vmatpush1.bf16.msra.mxu0 0
      %910 = vmatprep.subr.bf16.mxu0 0
      %911 = vmatpush1.bf16.msra.mxu0 0
      %912 = vmatprep.subr.bf16.mxu0 0
      %913 = vmatpush1.bf16.msra.mxu0 0
      %914 = vmatprep.subr.bf16.mxu0 0
      %915 = vmatpush1.bf16.msra.mxu0 0
      %916 = vmatprep.subr.bf16.mxu0 0
      %917 = vmatpush1.bf16.msra.mxu0 0
      %918 = vmatprep.subr.bf16.mxu0 0
      %919 = vmatpush1.bf16.msra.mxu0 0
      %920 = vmatprep.subr.bf16.mxu0 0
      %921 = vmatpush1.bf16.msra.mxu0 0
      %922 = vmatprep.subr.bf16.mxu0 0
      %923 = vmatpush1.bf16.msra.mxu0 0
      %924 = vmatprep.subr.bf16.mxu0 0
      %925 = vmatpush1.bf16.msra.mxu0 0
      %926 = vmatprep.subr.bf16.mxu0 0
      %927 = vmatpush1.bf16.msra.mxu0 0
      %928 = vmatprep.mubr.bf16.mxu0 0
      %929 = vmatmul.mubr.bf16.gmra.mrb[0].mxu0 %v838
      %v930 = vpop.f32.mrb[0].mxu0
      %v931 = vadd.f32 0.0, %v930
      %v932 = vpop.f32.mrb[0].mxu0
      %v933 = vadd.f32 0.0, %v932
      %v934 = vpop.f32.mrb[0].mxu0
      %v935 = vadd.f32 0.0, %v934
      %v936 = vpop.f32.mrb[0].mxu0
      %v937 = vadd.f32 0.0, %v936
      %938 = vmatprep.mubr.bf16.mxu0 0
      %939 = vmatmul.mubr.bf16.gmra.mrb[0].mxu0 %v841
      %v940 = vpop.f32.mrb[0].mxu0
      %v941 = vadd.f32 0.0, %v940
      %v942 = vpop.f32.mrb[0].mxu0
      %v943 = vadd.f32 0.0, %v942
      %v944 = vpop.f32.mrb[0].mxu0
      %v945 = vadd.f32 0.0, %v944
      %v946 = vpop.f32.mrb[0].mxu0
      %v947 = vadd.f32 0.0, %v946
      %948 = vdwg.mxu0
      %v949 = vadd.f32 %v555, %v878
      %v950 = vadd.f32 %v557, %v880
      %v951 = vadd.f32 %v628, %v931
      %v952 = vadd.f32 %v630, %v933
      %v953 = vadd.f32 %v559, %v882
      %v954 = vadd.f32 %v561, %v884
      %v955 = vadd.f32 %v632, %v935
      %v956 = vadd.f32 %v634, %v937
      %v957 = vadd.f32 %v565, %v888
      %v958 = vadd.f32 %v567, %v890
      %v959 = vadd.f32 %v638, %v941
      %v960 = vadd.f32 %v640, %v943
      %v961 = vadd.f32 %v569, %v892
      %v962 = vadd.f32 %v571, %v894
      %v963 = vadd.f32 %v642, %v945
      %v964 = vadd.f32 %v644, %v947
      %v965 = vmax.f32 %v949, 0.0
      %v966 = vmax.f32 %v950, 0.0
      %v967 = vmax.f32 %v951, 0.0
      %v968 = vmax.f32 %v952, 0.0
      %v969 = vmax.f32 %v953, 0.0
      %v970 = vmax.f32 %v954, 0.0
      %v971 = vmax.f32 %v955, 0.0
      %v972 = vmax.f32 %v956, 0.0
      %v973 = vmax.f32 %v957, 0.0
      %v974 = vmax.f32 %v958, 0.0
      %v975 = vmax.f32 %v959, 0.0
      %v976 = vmax.f32 %v960, 0.0
      %v977 = vmax.f32 %v961, 0.0
      %v978 = vmax.f32 %v962, 0.0
      %v979 = vmax.f32 %v963, 0.0
      %v980 = vmax.f32 %v964, 0.0
      %v981 = vpack.c.bf16 %v969, %v965
      %v982 = vpack.c.bf16 %v970, %v966
      %v983 = vpack.c.bf16 %v971, %v967
      %v984 = vpack.c.bf16 %v972, %v968
      %v985 = vpack.c.bf16 %v977, %v973
      %v986 = vpack.c.bf16 %v978, %v974
      %v987 = vpack.c.bf16 %v979, %v975
      %v988 = vpack.c.bf16 %v980, %v976
      %v989 = vld [vmem:[%s5] sm:$0xf]
      %v990 = vld [vmem:[%s5 + $0x4] sm:$0xf]
      %v991 = vld [vmem:[%s5 + $0x8] sm:$0xf]
      %v992 = vld [vmem:[%s5 + $0xc] sm:$0xf]
      %v993 = vld [vmem:[%s6] sm:$0xff]
      %v994 = vld [vmem:[%s6 + $0x8] sm:$0xff]
      %v995 = vld [vmem:[%s6 + $0x10] sm:$0xff]
      %v996 = vld [vmem:[%s6 + $0x18] sm:$0xff]
      %998 = vset.pattern.permute.xlu0 0
      %999 = vperm.xlu0 %998, %v993
      %v1000 = vpop.permute.xlu0 %999
      %1003 = vset.pattern.permute.xlu0 0
      %1004 = vperm.xlu0 %1003, %v994
      %v1005 = vpop.permute.xlu0 %1004
      %1008 = vset.pattern.permute.xlu0 0
      %1009 = vperm.xlu0 %1008, %v995
      %v1010 = vpop.permute.xlu0 %1009
      %1013 = vset.pattern.permute.xlu0 0
      %1014 = vperm.xlu0 %1013, %v996
      %v1015 = vpop.permute.xlu0 %1014
      %v1021 = vunpack.c.l.b16 %v989
      %v1022 = vunpack.c.l.b16 %v990
      %v1023 = vunpack.c.l.b16 %v991
      %v1024 = vunpack.c.l.b16 %v992
      %v1025 = vpack.c.b16 %v1022, %v1021
      %v1026 = vpack.c.b16 %v1024, %v1023
      %vm1027 = vcmask 261120
      %v1029 = vsel %vm1027, %v1025, 0
      %v1032 = vsel %vm1027, %v1026, 0
      %1034 = vmatprep.subr.bf16.mxu0 %v982
      %1035 = vmatpush1.bf16.msra.mxu0 %v981
      %1036 = vmatprep.subr.bf16.mxu0 %v986
      %1037 = vmatpush1.bf16.msra.mxu0 %v985
      %1038 = vmatprep.subr.bf16.mxu0 0
      %1039 = vmatpush1.bf16.msra.mxu0 0
      %1040 = vmatprep.subr.bf16.mxu0 0
      %1041 = vmatpush1.bf16.msra.mxu0 0
      %1042 = vmatprep.subr.bf16.mxu0 0
      %1043 = vmatpush1.bf16.msra.mxu0 0
      %1044 = vmatprep.subr.bf16.mxu0 0
      %1045 = vmatpush1.bf16.msra.mxu0 0
      %1046 = vmatprep.subr.bf16.mxu0 0
      %1047 = vmatpush1.bf16.msra.mxu0 0
      %1048 = vmatprep.subr.bf16.mxu0 0
      %1049 = vmatpush1.bf16.msra.mxu0 0
      %1050 = vmatprep.subr.bf16.mxu0 0
      %1051 = vmatpush1.bf16.msra.mxu0 0
      %1052 = vmatprep.subr.bf16.mxu0 0
      %1053 = vmatpush1.bf16.msra.mxu0 0
      %1054 = vmatprep.subr.bf16.mxu0 0
      %1055 = vmatpush1.bf16.msra.mxu0 0
      %1056 = vmatprep.subr.bf16.mxu0 0
      %1057 = vmatpush1.bf16.msra.mxu0 0
      %1058 = vmatprep.subr.bf16.mxu0 0
      %1059 = vmatpush1.bf16.msra.mxu0 0
      %1060 = vmatprep.subr.bf16.mxu0 0
      %1061 = vmatpush1.bf16.msra.mxu0 0
      %1062 = vmatprep.subr.bf16.mxu0 0
      %1063 = vmatpush1.bf16.msra.mxu0 0
      %1064 = vmatprep.subr.bf16.mxu0 0
      %1065 = vmatpush1.bf16.msra.mxu0 0
      %1066 = vmatprep.mubr.bf16.mxu0 0
      %1067 = vmatmul.mubr.bf16.gmra.mrb[0].mxu0 %v1029
      %v1068 = vpop.f32.mrb[0].mxu0
      %v1069 = vadd.f32 %v1000, %v1068
      %v1070 = vpop.f32.mrb[0].mxu0
      %v1071 = vadd.f32 %v1000, %v1070
      %v1072 = vpop.f32.mrb[0].mxu0
      %v1073 = vadd.f32 %v1005, %v1072
      %v1074 = vpop.f32.mrb[0].mxu0
      %v1075 = vadd.f32 %v1005, %v1074
      %1076 = vmatprep.mubr.bf16.mxu0 0
      %1077 = vmatmul.mubr.bf16.gmra.mrb[0].mxu0 %v1032
      %v1078 = vpop.f32.mrb[0].mxu0
      %v1079 = vadd.f32 %v1010, %v1078
      %v1080 = vpop.f32.mrb[0].mxu0
      %v1081 = vadd.f32 %v1010, %v1080
      %v1082 = vpop.f32.mrb[0].mxu0
      %v1083 = vadd.f32 %v1015, %v1082
      %v1084 = vpop.f32.mrb[0].mxu0
      %v1085 = vadd.f32 %v1015, %v1084
      %1086 = vdwg.mxu0
      %1087 = vmatprep.subr.bf16.mxu0 %v984
      %1088 = vmatpush1.bf16.msra.mxu0 %v983
      %1089 = vmatprep.subr.bf16.mxu0 %v988
      %1090 = vmatpush1.bf16.msra.mxu0 %v987
      %1091 = vmatprep.subr.bf16.mxu0 0
      %1092 = vmatpush1.bf16.msra.mxu0 0
      %1093 = vmatprep.subr.bf16.mxu0 0
      %1094 = vmatpush1.bf16.msra.mxu0 0
      %1095 = vmatprep.subr.bf16.mxu0 0
      %1096 = vmatpush1.bf16.msra.mxu0 0
      %1097 = vmatprep.subr.bf16.mxu0 0
      %1098 = vmatpush1.bf16.msra.mxu0 0
      %1099 = vmatprep.subr.bf16.mxu0 0
      %1100 = vmatpush1.bf16.msra.mxu0 0
      %1101 = vmatprep.subr.bf16.mxu0 0
      %1102 = vmatpush1.bf16.msra.mxu0 0
      %1103 = vmatprep.subr.bf16.mxu0 0
      %1104 = vmatpush1.bf16.msra.mxu0 0
      %1105 = vmatprep.subr.bf16.mxu0 0
      %1106 = vmatpush1.bf16.msra.mxu0 0
      %1107 = vmatprep.subr.bf16.mxu0 0
      %1108 = vmatpush1.bf16.msra.mxu0 0
      %1109 = vmatprep.subr.bf16.mxu0 0
      %1110 = vmatpush1.bf16.msra.mxu0 0
      %1111 = vmatprep.subr.bf16.mxu0 0
      %1112 = vmatpush1.bf16.msra.mxu0 0
      %1113 = vmatprep.subr.bf16.mxu0 0
      %1114 = vmatpush1.bf16.msra.mxu0 0
      %1115 = vmatprep.subr.bf16.mxu0 0
      %1116 = vmatpush1.bf16.msra.mxu0 0
      %1117 = vmatprep.subr.bf16.mxu0 0
      %1118 = vmatpush1.bf16.msra.mxu0 0
      %1119 = vmatprep.mubr.bf16.mxu0 0
      %1120 = vmatmul.mubr.bf16.gmra.mrb[0].mxu0 %v1029
      %v1121 = vpop.f32.mrb[0].mxu0
      %v1122 = vadd.f32 %v1000, %v1121
      %v1123 = vpop.f32.mrb[0].mxu0
      %v1124 = vadd.f32 %v1000, %v1123
      %v1125 = vpop.f32.mrb[0].mxu0
      %v1126 = vadd.f32 %v1005, %v1125
      %v1127 = vpop.f32.mrb[0].mxu0
      %v1128 = vadd.f32 %v1005, %v1127
      %1129 = vmatprep.mubr.bf16.mxu0 0
      %1130 = vmatmul.mubr.bf16.gmra.mrb[0].mxu0 %v1032
      %v1131 = vpop.f32.mrb[0].mxu0
      %v1132 = vadd.f32 %v1010, %v1131
      %v1133 = vpop.f32.mrb[0].mxu0
      %v1134 = vadd.f32 %v1010, %v1133
      %v1135 = vpop.f32.mrb[0].mxu0
      %v1136 = vadd.f32 %v1015, %v1135
      %v1137 = vpop.f32.mrb[0].mxu0
      %v1138 = vadd.f32 %v1015, %v1137
      %1139 = vdwg.mxu0
      %v1140 = vld [vmem:[%s4] sm:$0xf]
      %v1141 = vld [vmem:[%s4 + $0x4] sm:$0xf]
      %v1142 = vld [vmem:[%s4 + $0x8] sm:$0xf]
      %v1143 = vld [vmem:[%s4 + $0xc] sm:$0xf]
      %1144 = vrot.lane.b32.xlu0 %v965, 1
      %v1145 = vpop.permute.xlu0 %1144
      %1146 = vrot.lane.b32.xlu0 %v969, 1
      %v1147 = vpop.permute.xlu0 %1146
      %1148 = vrot.lane.b32.xlu0 %v973, 1
      %v1149 = vpop.permute.xlu0 %1148
      %1150 = vrot.lane.b32.xlu0 %v977, 1
      %v1151 = vpop.permute.xlu0 %1150
      %1152 = vrot.lane.b32.xlu0 %v966, 1
      %v1153 = vpop.permute.xlu0 %1152
      %1154 = vrot.lane.b32.xlu0 %v970, 1
      %v1155 = vpop.permute.xlu0 %1154
      %1156 = vrot.lane.b32.xlu0 %v974, 1
      %v1157 = vpop.permute.xlu0 %1156
      %1158 = vrot.lane.b32.xlu0 %v978, 1
      %v1159 = vpop.permute.xlu0 %1158
      %1160 = vrot.lane.b32.xlu0 %v967, 1
      %v1161 = vpop.permute.xlu0 %1160
      %1162 = vrot.lane.b32.xlu0 %v971, 1
      %v1163 = vpop.permute.xlu0 %1162
      %1164 = vrot.lane.b32.xlu0 %v975, 1
      %v1165 = vpop.permute.xlu0 %1164
      %1166 = vrot.lane.b32.xlu0 %v979, 1
      %v1167 = vpop.permute.xlu0 %1166
      %1168 = vrot.lane.b32.xlu0 %v968, 1
      %v1169 = vpop.permute.xlu0 %1168
      %1170 = vrot.lane.b32.xlu0 %v972, 1
      %v1171 = vpop.permute.xlu0 %1170
      %1172 = vrot.lane.b32.xlu0 %v976, 1
      %v1173 = vpop.permute.xlu0 %1172
      %1174 = vrot.lane.b32.xlu0 %v980, 1
      %v1175 = vpop.permute.xlu0 %1174
      %v1176 = vsel %vm746, %v1161, %v1169
      %v1177 = vsel %vm746, %v1163, %v1171
      %v1178 = vsel %vm746, %v1165, %v1173
      %v1179 = vsel %vm746, %v1167, %v1175
      %v1180 = vsel %vm746, %v1153, %v1161
      %v1181 = vsel %vm746, %v1155, %v1163
      %v1182 = vsel %vm746, %v1157, %v1165
      %v1183 = vsel %vm746, %v1159, %v1167
      %v1184 = vsel %vm746, %v1145, %v1153
      %v1185 = vsel %vm746, %v1147, %v1155
      %v1186 = vsel %vm746, %v1149, %v1157
      %v1187 = vsel %vm746, %v1151, %v1159
      %v1188 = vsel %vm746, %v1169, %v1145
      %v1189 = vsel %vm746, %v1171, %v1147
      %v1190 = vsel %vm746, %v1173, %v1149
      %v1191 = vsel %vm746, %v1175, %v1151
      %v1192 = vmul.f32 %v1188, %v678
      %v1193 = vmul.f32 %v1184, %v679
      %v1194 = vmul.f32 %v1180, %v680
      %v1195 = vmul.f32 %v1176, %v681
      %v1196 = vmul.f32 %v1189, %v678
      %v1197 = vmul.f32 %v1185, %v679
      %v1198 = vmul.f32 %v1181, %v680
      %v1199 = vmul.f32 %v1177, %v681
      %v1200 = vmul.f32 %v1190, %v678
      %v1201 = vmul.f32 %v1186, %v679
      %v1202 = vmul.f32 %v1182, %v680
      %v1203 = vmul.f32 %v1178, %v681
      %v1204 = vmul.f32 %v1191, %v678
      %v1205 = vmul.f32 %v1187, %v679
      %v1206 = vmul.f32 %v1183, %v680
      %v1207 = vmul.f32 %v1179, %v681
      %v1208 = vpack.c.bf16 %v1196, %v1192
      %v1209 = vpack.c.bf16 %v1197, %v1193
      %v1210 = vpack.c.bf16 %v1198, %v1194
      %v1211 = vpack.c.bf16 %v1199, %v1195
      %v1212 = vpack.c.bf16 %v1204, %v1200
      %v1213 = vpack.c.bf16 %v1205, %v1201
      %v1214 = vpack.c.bf16 %v1206, %v1202
      %v1215 = vpack.c.bf16 %v1207, %v1203
      %v1220 = vunpack.c.l.b16 %v1140
      %v1221 = vunpack.c.l.b16 %v1141
      %v1222 = vunpack.c.l.b16 %v1142
      %v1223 = vunpack.c.l.b16 %v1143
      %v1224 = vpack.c.b16 %v1221, %v1220
      %v1225 = vpack.c.b16 %v1223, %v1222
      %v1227 = vsel %vm1027, %v1224, 0
      %v1230 = vsel %vm1027, %v1225, 0
      %1232 = vmatprep.subr.bf16.mxu0 %v1209
      %1233 = vmatpush1.bf16.msra.mxu0 %v1208
      %1234 = vmatprep.subr.bf16.mxu0 %v1213
      %1235 = vmatpush1.bf16.msra.mxu0 %v1212
      %1236 = vmatprep.subr.bf16.mxu0 0
      %1237 = vmatpush1.bf16.msra.mxu0 0
      %1238 = vmatprep.subr.bf16.mxu0 0
      %1239 = vmatpush1.bf16.msra.mxu0 0
      %1240 = vmatprep.subr.bf16.mxu0 0
      %1241 = vmatpush1.bf16.msra.mxu0 0
      %1242 = vmatprep.subr.bf16.mxu0 0
      %1243 = vmatpush1.bf16.msra.mxu0 0
      %1244 = vmatprep.subr.bf16.mxu0 0
      %1245 = vmatpush1.bf16.msra.mxu0 0
      %1246 = vmatprep.subr.bf16.mxu0 0
      %1247 = vmatpush1.bf16.msra.mxu0 0
      %1248 = vmatprep.subr.bf16.mxu0 0
      %1249 = vmatpush1.bf16.msra.mxu0 0
      %1250 = vmatprep.subr.bf16.mxu0 0
      %1251 = vmatpush1.bf16.msra.mxu0 0
      %1252 = vmatprep.subr.bf16.mxu0 0
      %1253 = vmatpush1.bf16.msra.mxu0 0
      %1254 = vmatprep.subr.bf16.mxu0 0
      %1255 = vmatpush1.bf16.msra.mxu0 0
      %1256 = vmatprep.subr.bf16.mxu0 0
      %1257 = vmatpush1.bf16.msra.mxu0 0
      %1258 = vmatprep.subr.bf16.mxu0 0
      %1259 = vmatpush1.bf16.msra.mxu0 0
      %1260 = vmatprep.subr.bf16.mxu0 0
      %1261 = vmatpush1.bf16.msra.mxu0 0
      %1262 = vmatprep.subr.bf16.mxu0 0
      %1263 = vmatpush1.bf16.msra.mxu0 0
      %1264 = vmatprep.mubr.bf16.mxu0 0
      %1265 = vmatmul.mubr.bf16.gmra.mrb[0].mxu0 %v1227
      %v1266 = vpop.f32.mrb[0].mxu0
      %v1267 = vadd.f32 0.0, %v1266
      %v1268 = vpop.f32.mrb[0].mxu0
      %v1269 = vadd.f32 0.0, %v1268
      %v1270 = vpop.f32.mrb[0].mxu0
      %v1271 = vadd.f32 0.0, %v1270
      %v1272 = vpop.f32.mrb[0].mxu0
      %v1273 = vadd.f32 0.0, %v1272
      %1274 = vmatprep.mubr.bf16.mxu0 0
      %1275 = vmatmul.mubr.bf16.gmra.mrb[0].mxu0 %v1230
      %v1276 = vpop.f32.mrb[0].mxu0
      %v1277 = vadd.f32 0.0, %v1276
      %v1278 = vpop.f32.mrb[0].mxu0
      %v1279 = vadd.f32 0.0, %v1278
      %v1280 = vpop.f32.mrb[0].mxu0
      %v1281 = vadd.f32 0.0, %v1280
      %v1282 = vpop.f32.mrb[0].mxu0
      %v1283 = vadd.f32 0.0, %v1282
      %1284 = vdwg.mxu0
      %1285 = vmatprep.subr.bf16.mxu0 %v1211
      %1286 = vmatpush1.bf16.msra.mxu0 %v1210
      %1287 = vmatprep.subr.bf16.mxu0 %v1215
      %1288 = vmatpush1.bf16.msra.mxu0 %v1214
      %1289 = vmatprep.subr.bf16.mxu0 0
      %1290 = vmatpush1.bf16.msra.mxu0 0
      %1291 = vmatprep.subr.bf16.mxu0 0
      %1292 = vmatpush1.bf16.msra.mxu0 0
      %1293 = vmatprep.subr.bf16.mxu0 0
      %1294 = vmatpush1.bf16.msra.mxu0 0
      %1295 = vmatprep.subr.bf16.mxu0 0
      %1296 = vmatpush1.bf16.msra.mxu0 0
      %1297 = vmatprep.subr.bf16.mxu0 0
      %1298 = vmatpush1.bf16.msra.mxu0 0
      %1299 = vmatprep.subr.bf16.mxu0 0
      %1300 = vmatpush1.bf16.msra.mxu0 0
      %1301 = vmatprep.subr.bf16.mxu0 0
      %1302 = vmatpush1.bf16.msra.mxu0 0
      %1303 = vmatprep.subr.bf16.mxu0 0
      %1304 = vmatpush1.bf16.msra.mxu0 0
      %1305 = vmatprep.subr.bf16.mxu0 0
      %1306 = vmatpush1.bf16.msra.mxu0 0
      %1307 = vmatprep.subr.bf16.mxu0 0
      %1308 = vmatpush1.bf16.msra.mxu0 0
      %1309 = vmatprep.subr.bf16.mxu0 0
      %1310 = vmatpush1.bf16.msra.mxu0 0
      %1311 = vmatprep.subr.bf16.mxu0 0
      %1312 = vmatpush1.bf16.msra.mxu0 0
      %1313 = vmatprep.subr.bf16.mxu0 0
      %1314 = vmatpush1.bf16.msra.mxu0 0
      %1315 = vmatprep.subr.bf16.mxu0 0
      %1316 = vmatpush1.bf16.msra.mxu0 0
      %1317 = vmatprep.mubr.bf16.mxu0 0
      %1318 = vmatmul.mubr.bf16.gmra.mrb[0].mxu0 %v1227
      %v1319 = vpop.f32.mrb[0].mxu0
      %v1320 = vadd.f32 0.0, %v1319
      %v1321 = vpop.f32.mrb[0].mxu0
      %v1322 = vadd.f32 0.0, %v1321
      %v1323 = vpop.f32.mrb[0].mxu0
      %v1324 = vadd.f32 0.0, %v1323
      %v1325 = vpop.f32.mrb[0].mxu0
      %v1326 = vadd.f32 0.0, %v1325
      %1327 = vmatprep.mubr.bf16.mxu0 0
      %1328 = vmatmul.mubr.bf16.gmra.mrb[0].mxu0 %v1230
      %v1329 = vpop.f32.mrb[0].mxu0
      %v1330 = vadd.f32 0.0, %v1329
      %v1331 = vpop.f32.mrb[0].mxu0
      %v1332 = vadd.f32 0.0, %v1331
      %v1333 = vpop.f32.mrb[0].mxu0
      %v1334 = vadd.f32 0.0, %v1333
      %v1335 = vpop.f32.mrb[0].mxu0
      %v1336 = vadd.f32 0.0, %v1335
      %1337 = vdwg.mxu0
      %v1338 = vadd.f32 %v1069, %v1267
      %v1339 = vadd.f32 %v1071, %v1269
      %v1340 = vadd.f32 %v1122, %v1320
      %v1341 = vadd.f32 %v1124, %v1322
      %v1342 = vadd.f32 %v1073, %v1271
      %v1343 = vadd.f32 %v1075, %v1273
      %v1344 = vadd.f32 %v1126, %v1324
      %v1345 = vadd.f32 %v1128, %v1326
      %v1346 = vadd.f32 %v1079, %v1277
      %v1347 = vadd.f32 %v1081, %v1279
      %v1348 = vadd.f32 %v1132, %v1330
      %v1349 = vadd.f32 %v1134, %v1332
      %v1350 = vadd.f32 %v1083, %v1281
      %v1351 = vadd.f32 %v1085, %v1283
      %v1352 = vadd.f32 %v1136, %v1334
      %v1353 = vadd.f32 %v1138, %v1336
      %v1354 = vmax.f32 %v1338, 0.0
      %v1355 = vmax.f32 %v1339, 0.0
      %v1356 = vmax.f32 %v1340, 0.0
      %v1357 = vmax.f32 %v1341, 0.0
      %v1358 = vmax.f32 %v1342, 0.0
      %v1359 = vmax.f32 %v1343, 0.0
      %v1360 = vmax.f32 %v1344, 0.0
      %v1361 = vmax.f32 %v1345, 0.0
      %v1362 = vmax.f32 %v1346, 0.0
      %v1363 = vmax.f32 %v1347, 0.0
      %v1364 = vmax.f32 %v1348, 0.0
      %v1365 = vmax.f32 %v1349, 0.0
      %v1366 = vmax.f32 %v1350, 0.0
      %v1367 = vmax.f32 %v1351, 0.0
      %v1368 = vmax.f32 %v1352, 0.0
      %v1369 = vmax.f32 %v1353, 0.0
      %v1370 = vadd.f32 %v1354, %v575
      %v1371 = vadd.f32 %v1355, %v577
      %v1372 = vadd.f32 %v1356, %v648
      %v1373 = vadd.f32 %v1357, %v650
      %v1374 = vadd.f32 %v1358, %v579
      %v1375 = vadd.f32 %v1359, %v581
      %v1376 = vadd.f32 %v1360, %v652
      %v1377 = vadd.f32 %v1361, %v654
      %v1378 = vadd.f32 %v1362, %v585
      %v1379 = vadd.f32 %v1363, %v587
      %v1380 = vadd.f32 %v1364, %v658
      %v1381 = vadd.f32 %v1365, %v660
      %v1382 = vadd.f32 %v1366, %v589
      %v1383 = vadd.f32 %v1367, %v591
      %v1384 = vadd.f32 %v1368, %v662
      %v1385 = vadd.f32 %v1369, %v664
      %v1386 = vmax.f32 %v1370, 0.0
      %v1387 = vmax.f32 %v1371, 0.0
      %v1388 = vmax.f32 %v1372, 0.0
      %v1389 = vmax.f32 %v1373, 0.0
      %v1390 = vmax.f32 %v1374, 0.0
      %v1391 = vmax.f32 %v1375, 0.0
      %v1392 = vmax.f32 %v1376, 0.0
      %v1393 = vmax.f32 %v1377, 0.0
      %v1394 = vmax.f32 %v1378, 0.0
      %v1395 = vmax.f32 %v1379, 0.0
      %v1396 = vmax.f32 %v1380, 0.0
      %v1397 = vmax.f32 %v1381, 0.0
      %v1398 = vmax.f32 %v1382, 0.0
      %v1399 = vmax.f32 %v1383, 0.0
      %v1400 = vmax.f32 %v1384, 0.0
      %v1401 = vmax.f32 %v1385, 0.0
      %v1402 = vld [vmem:[%s7] sm:$0xf]
      %v1403 = vld [vmem:[%s7 + $0x4] sm:$0xf]
      %v1404 = vld [vmem:[%s7 + $0x8] sm:$0xf]
      %v1405 = vld [vmem:[%s7 + $0xc] sm:$0xf]
      %v1406 = vpack.c.bf16 %v1390, %v1386
      %v1407 = vpack.c.bf16 %v1391, %v1387
      %v1408 = vpack.c.bf16 %v1392, %v1388
      %v1409 = vpack.c.bf16 %v1393, %v1389
      %v1410 = vpack.c.bf16 %v1398, %v1394
      %v1411 = vpack.c.bf16 %v1399, %v1395
      %v1412 = vpack.c.bf16 %v1400, %v1396
      %v1413 = vpack.c.bf16 %v1401, %v1397
      %v1414 = vld [vmem:[%s8] sm:$0xff]
      %v1415 = vld [vmem:[%s8 + $0x8] sm:$0xff]
      %v1416 = vld [vmem:[%s8 + $0x10] sm:$0xff]
      %v1417 = vld [vmem:[%s8 + $0x18] sm:$0xff]
      %1419 = vset.pattern.permute.xlu0 0
      %1420 = vperm.xlu0 %1419, %v1414
      %v1421 = vpop.permute.xlu0 %1420
      %1424 = vset.pattern.permute.xlu0 0
      %1425 = vperm.xlu0 %1424, %v1415
      %v1426 = vpop.permute.xlu0 %1425
      %1429 = vset.pattern.permute.xlu0 0
      %1430 = vperm.xlu0 %1429, %v1416
      %v1431 = vpop.permute.xlu0 %1430
      %1434 = vset.pattern.permute.xlu0 0
      %1435 = vperm.xlu0 %1434, %v1417
      %v1436 = vpop.permute.xlu0 %1435
      %v1442 = vunpack.c.l.b16 %v1402
      %v1443 = vunpack.c.l.b16 %v1403
      %v1444 = vunpack.c.l.b16 %v1404
      %v1445 = vunpack.c.l.b16 %v1405
      %v1446 = vpack.c.b16 %v1443, %v1442
      %v1447 = vpack.c.b16 %v1445, %v1444
      %v1449 = vsel %vm1027, %v1446, 0
      %v1452 = vsel %vm1027, %v1447, 0
      %1454 = vmatprep.subr.bf16.mxu0 %v1407
      %1455 = vmatpush1.bf16.msra.mxu0 %v1406
      %1456 = vmatprep.subr.bf16.mxu0 %v1411
      %1457 = vmatpush1.bf16.msra.mxu0 %v1410
      %1458 = vmatprep.subr.bf16.mxu0 0
      %1459 = vmatpush1.bf16.msra.mxu0 0
      %1460 = vmatprep.subr.bf16.mxu0 0
      %1461 = vmatpush1.bf16.msra.mxu0 0
      %1462 = vmatprep.subr.bf16.mxu0 0
      %1463 = vmatpush1.bf16.msra.mxu0 0
      %1464 = vmatprep.subr.bf16.mxu0 0
      %1465 = vmatpush1.bf16.msra.mxu0 0
      %1466 = vmatprep.subr.bf16.mxu0 0
      %1467 = vmatpush1.bf16.msra.mxu0 0
      %1468 = vmatprep.subr.bf16.mxu0 0
      %1469 = vmatpush1.bf16.msra.mxu0 0
      %1470 = vmatprep.subr.bf16.mxu0 0
      %1471 = vmatpush1.bf16.msra.mxu0 0
      %1472 = vmatprep.subr.bf16.mxu0 0
      %1473 = vmatpush1.bf16.msra.mxu0 0
      %1474 = vmatprep.subr.bf16.mxu0 0
      %1475 = vmatpush1.bf16.msra.mxu0 0
      %1476 = vmatprep.subr.bf16.mxu0 0
      %1477 = vmatpush1.bf16.msra.mxu0 0
      %1478 = vmatprep.subr.bf16.mxu0 0
      %1479 = vmatpush1.bf16.msra.mxu0 0
      %1480 = vmatprep.subr.bf16.mxu0 0
      %1481 = vmatpush1.bf16.msra.mxu0 0
      %1482 = vmatprep.subr.bf16.mxu0 0
      %1483 = vmatpush1.bf16.msra.mxu0 0
      %1484 = vmatprep.subr.bf16.mxu0 0
      %1485 = vmatpush1.bf16.msra.mxu0 0
      %1486 = vmatprep.mubr.bf16.mxu0 0
      %1487 = vmatmul.mubr.bf16.gmra.mrb[0].mxu0 %v1449
      %v1488 = vpop.f32.mrb[0].mxu0
      %v1489 = vadd.f32 %v1421, %v1488
      %v1490 = vpop.f32.mrb[0].mxu0
      %v1491 = vadd.f32 %v1421, %v1490
      %v1492 = vpop.f32.mrb[0].mxu0
      %v1493 = vadd.f32 %v1426, %v1492
      %v1494 = vpop.f32.mrb[0].mxu0
      %v1495 = vadd.f32 %v1426, %v1494
      %1496 = vmatprep.mubr.bf16.mxu0 0
      %1497 = vmatmul.mubr.bf16.gmra.mrb[0].mxu0 %v1452
      %v1498 = vpop.f32.mrb[0].mxu0
      %v1499 = vadd.f32 %v1431, %v1498
      %v1500 = vpop.f32.mrb[0].mxu0
      %v1501 = vadd.f32 %v1431, %v1500
      %v1502 = vpop.f32.mrb[0].mxu0
      %v1503 = vadd.f32 %v1436, %v1502
      %v1504 = vpop.f32.mrb[0].mxu0
      %v1505 = vadd.f32 %v1436, %v1504
      %1506 = vdwg.mxu0
      %1507 = vmatprep.subr.bf16.mxu0 %v1409
      %1508 = vmatpush1.bf16.msra.mxu0 %v1408
      %1509 = vmatprep.subr.bf16.mxu0 %v1413
      %1510 = vmatpush1.bf16.msra.mxu0 %v1412
      %1511 = vmatprep.subr.bf16.mxu0 0
      %1512 = vmatpush1.bf16.msra.mxu0 0
      %1513 = vmatprep.subr.bf16.mxu0 0
      %1514 = vmatpush1.bf16.msra.mxu0 0
      %1515 = vmatprep.subr.bf16.mxu0 0
      %1516 = vmatpush1.bf16.msra.mxu0 0
      %1517 = vmatprep.subr.bf16.mxu0 0
      %1518 = vmatpush1.bf16.msra.mxu0 0
      %1519 = vmatprep.subr.bf16.mxu0 0
      %1520 = vmatpush1.bf16.msra.mxu0 0
      %1521 = vmatprep.subr.bf16.mxu0 0
      %1522 = vmatpush1.bf16.msra.mxu0 0
      %1523 = vmatprep.subr.bf16.mxu0 0
      %1524 = vmatpush1.bf16.msra.mxu0 0
      %1525 = vmatprep.subr.bf16.mxu0 0
      %1526 = vmatpush1.bf16.msra.mxu0 0
      %1527 = vmatprep.subr.bf16.mxu0 0
      %1528 = vmatpush1.bf16.msra.mxu0 0
      %1529 = vmatprep.subr.bf16.mxu0 0
      %1530 = vmatpush1.bf16.msra.mxu0 0
      %1531 = vmatprep.subr.bf16.mxu0 0
      %1532 = vmatpush1.bf16.msra.mxu0 0
      %1533 = vmatprep.subr.bf16.mxu0 0
      %1534 = vmatpush1.bf16.msra.mxu0 0
      %1535 = vmatprep.subr.bf16.mxu0 0
      %1536 = vmatpush1.bf16.msra.mxu0 0
      %1537 = vmatprep.subr.bf16.mxu0 0
      %1538 = vmatpush1.bf16.msra.mxu0 0
      %1539 = vmatprep.mubr.bf16.mxu0 0
      %1540 = vmatmul.mubr.bf16.gmra.mrb[0].mxu0 %v1449
      %v1541 = vpop.f32.mrb[0].mxu0
      %v1542 = vadd.f32 %v1421, %v1541
      %v1543 = vpop.f32.mrb[0].mxu0
      %v1544 = vadd.f32 %v1421, %v1543
      %v1545 = vpop.f32.mrb[0].mxu0
      %v1546 = vadd.f32 %v1426, %v1545
      %v1547 = vpop.f32.mrb[0].mxu0
      %v1548 = vadd.f32 %v1426, %v1547
      %1549 = vmatprep.mubr.bf16.mxu0 0
      %1550 = vmatmul.mubr.bf16.gmra.mrb[0].mxu0 %v1452
      %v1551 = vpop.f32.mrb[0].mxu0
      %v1552 = vadd.f32 %v1431, %v1551
      %v1553 = vpop.f32.mrb[0].mxu0
      %v1554 = vadd.f32 %v1431, %v1553
      %v1555 = vpop.f32.mrb[0].mxu0
      %v1556 = vadd.f32 %v1436, %v1555
      %v1557 = vpop.f32.mrb[0].mxu0
      %v1558 = vadd.f32 %v1436, %v1557
      %1559 = vdwg.mxu0
      %1560 = vst [vmem:[%s367] sm:$0xff] %v1489
      %1561 = vst [vmem:[%s367 + $0x8] sm:$0xff] %v1491
      %1562 = vst [vmem:[%s367 + $0x10] sm:$0xff] %v1542
      %1563 = vst [vmem:[%s367 + $0x18] sm:$0xff] %v1544
      %1564 = vst [vmem:[%s367 + $0x20] sm:$0xff] %v1493
      %1565 = vst [vmem:[%s367 + $0x28] sm:$0xff] %v1495
      %1566 = vst [vmem:[%s367 + $0x30] sm:$0xff] %v1546
      %1567 = vst [vmem:[%s367 + $0x38] sm:$0xff] %v1548
      %1568 = vst [vmem:[%s367 + $0x40] sm:$0xff] %v1499
      %1569 = vst [vmem:[%s367 + $0x48] sm:$0xff] %v1501
      %1570 = vst [vmem:[%s367 + $0x50] sm:$0xff] %v1552
      %1571 = vst [vmem:[%s367 + $0x58] sm:$0xff] %v1554
      %1572 = vst [vmem:[%s367 + $0x60] sm:$0xff] %v1503
      %1573 = vst [vmem:[%s367 + $0x68] sm:$0xff] %v1505
      %1574 = vst [vmem:[%s367 + $0x70] sm:$0xff] %v1556
      %1575 = vst [vmem:[%s367 + $0x78] sm:$0xff] %v1558
      %1576 = vmax.xlane.f32.xlu0 %v1489
      %v1577 = vpop.xlane.xlu0 %1576
      %1578 = vmax.xlane.f32.xlu0 %v1493
      %v1579 = vpop.xlane.xlu0 %1578
      %1580 = vmax.xlane.f32.xlu0 %v1499
      %v1581 = vpop.xlane.xlu0 %1580
      %1582 = vmax.xlane.f32.xlu0 %v1503
      %v1583 = vpop.xlane.xlu0 %1582
      %1584 = vmax.xlane.f32.xlu0 %v1491
      %v1585 = vpop.xlane.xlu0 %1584
      %1586 = vmax.xlane.f32.xlu0 %v1495
      %v1587 = vpop.xlane.xlu0 %1586
      %1588 = vmax.xlane.f32.xlu0 %v1501
      %v1589 = vpop.xlane.xlu0 %1588
      %1590 = vmax.xlane.f32.xlu0 %v1505
      %v1591 = vpop.xlane.xlu0 %1590
      %1592 = vmax.xlane.f32.xlu0 %v1542
      %v1593 = vpop.xlane.xlu0 %1592
      %1594 = vmax.xlane.f32.xlu0 %v1546
      %v1595 = vpop.xlane.xlu0 %1594
      %1596 = vmax.xlane.f32.xlu0 %v1552
      %v1597 = vpop.xlane.xlu0 %1596
      %1598 = vmax.xlane.f32.xlu0 %v1556
      %v1599 = vpop.xlane.xlu0 %1598
      %1600 = vmax.xlane.f32.xlu0 %v1544
      %v1601 = vpop.xlane.xlu0 %1600
      %1602 = vmax.xlane.f32.xlu0 %v1548
      %v1603 = vpop.xlane.xlu0 %1602
      %1604 = vmax.xlane.f32.xlu0 %v1554
      %v1605 = vpop.xlane.xlu0 %1604
      %1606 = vmax.xlane.f32.xlu0 %v1558
      %v1607 = vpop.xlane.xlu0 %1606
      %vm1608 = vcmask 7168
      %1609 = vst.msk [vmem:[%s372] sm:$0xff] %vm1608, %v1577
      %1610 = vst.msk [vmem:[%s372 + $0x8] sm:$0xff] %vm1608, %v1579
      %1611 = vst.msk [vmem:[%s372 + $0x10] sm:$0xff] %vm1608, %v1581
      %1612 = vst.msk [vmem:[%s372 + $0x18] sm:$0xff] %vm1608, %v1583
      %1613 = vst.msk [vmem:[%s372 + $0x20] sm:$0xff] %vm1608, %v1585
      %1614 = vst.msk [vmem:[%s372 + $0x28] sm:$0xff] %vm1608, %v1587
      %1615 = vst.msk [vmem:[%s372 + $0x30] sm:$0xff] %vm1608, %v1589
      %1616 = vst.msk [vmem:[%s372 + $0x38] sm:$0xff] %vm1608, %v1591
      %1617 = vst.msk [vmem:[%s372 + $0x40] sm:$0xff] %vm1608, %v1593
      %1618 = vst.msk [vmem:[%s372 + $0x48] sm:$0xff] %vm1608, %v1595
      %1619 = vst.msk [vmem:[%s372 + $0x50] sm:$0xff] %vm1608, %v1597
      %1620 = vst.msk [vmem:[%s372 + $0x58] sm:$0xff] %vm1608, %v1599
      %1621 = vst.msk [vmem:[%s372 + $0x60] sm:$0xff] %vm1608, %v1601
      %1622 = vst.msk [vmem:[%s372 + $0x68] sm:$0xff] %vm1608, %v1603
      %1623 = vst.msk [vmem:[%s372 + $0x70] sm:$0xff] %vm1608, %v1605
      %1624 = vst.msk [vmem:[%s372 + $0x78] sm:$0xff] %vm1608, %v1607
      %p1625 = scmp.lt.s32.totalorder %s22, 1
      %s1626 = scalar_select %p1625, %s22, 1
      %s1627 = smul.addr %s1626, 16
      %s1628 = smul.addr %s1627, 8
      %s1629 = scalar_lea.vmem %s9, %s1628
      %p1630 = scmp.lt.s32.totalorder %s22, 1
      %s1631 = scalar_select %p1630, %s22, 1
      %s1632 = smul.addr %s1631, 16
      %s1633 = smul.addr %s1632, 8
      %s1634 = scalar_lea.vmem %s10, %s1633
      // Predicated region
      $region57: #{_lambda_.1} parent=55 // pred_check
        %p1635 = pneg %p234
      $region58: #{_lambda_.1} parent=55 // pred_check_branch
        %1637 = sbr.rel (%p1635) target = $region60
      $region59: #{_lambda_.1} parent=55 // pred_region
        _
      $region60: #{_lambda_.1} parent=55 // pred_fallthru
        _
      // Predicated region
      $region61: #{_lambda_.1} parent=55 // pred_check
        %p1638 = pneg %p260
      $region62: #{_lambda_.1} parent=55 // pred_check_branch
        %1640 = sbr.rel (%p1638) target = $region64
      $region63: #{_lambda_.1} parent=55 // pred_region
        _
      $region64: #{_lambda_.1} parent=55 // pred_fallthru
        _
    $region56: #{_lambda_.1} parent=5 // pred_fallthru
      _
    %p1641 = scmp.le.s32.totalorder 2, %s17
    // Predicated region
    $region65: #{_lambda_.1} parent=5 // pred_check
      %p1642 = pneg %p1641
    $region66: #{_lambda_.1} parent=5 // pred_check_branch
      %1644 = sbr.rel (%p1642) target = $region68
    $region67: #{_lambda_.1} parent=5 // pred_region
      %s1645 = ssub.s32 %s17, 2
      // Predicated region
      $region69: #{_lambda_.1} parent=67 // pred_check
        %p1646 = pneg %p240
      $region70: #{_lambda_.1} parent=67 // pred_check_branch
        %1648 = sbr.rel (%p1646) target = $region72
      $region71: #{_lambda_.1} parent=67 // pred_region
        %p1649 = scmp.lt.s32.totalorder %s23, 1
        %s1650 = scalar_select %p1649, %s23, 1
        %s1651 = smul.addr %s1650, 16
        %s1652 = smul.addr %s1651, 8
        %s1653 = scalar_lea.vmem %s9, %s1652
      $region72: #{_lambda_.1} parent=67 // pred_fallthru
        _
      // Predicated region
      $region73: #{_lambda_.1} parent=67 // pred_check
        %p1654 = pneg %p266
      $region74: #{_lambda_.1} parent=67 // pred_check_branch
        %1656 = sbr.rel (%p1654) target = $region76
      $region75: #{_lambda_.1} parent=67 // pred_region
        %p1657 = scmp.lt.s32.totalorder %s23, 1
        %s1658 = scalar_select %p1657, %s23, 1
        %s1659 = smul.addr %s1658, 16
        %s1660 = smul.addr %s1659, 8
        %s1661 = scalar_lea.vmem %s10, %s1660
      $region76: #{_lambda_.1} parent=67 // pred_fallthru
        _
    $region68: #{_lambda_.1} parent=5 // pred_fallthru
      _
  $region6: #{_lambda_.1} parent=0 // loop_footer
    %s21 = sadd.s32 1, %s17
  $region7: #{_lambda_.1} parent=0 // loop_footer_branch
    %16 = sbr.rel target = $region3
  $region8: #{_lambda_.1} parent=0 // loop_exit
    _

</llo_original>
